<compile_context>
chip_gen: v7x
topology: tpu7x:2x2x1
jax: 0.10.0
libtpu: 0.0.40
codegen_flags: <defaults>
</compile_context>

<pallas_src>
import jax
import jax.numpy as jnp
from jax.experimental import pallas as pl
from jax.experimental.pallas import tpu as pltpu

_LANE = 128                 # lane width: last dim of every tile
_FAST_PATH_MAX_ELEMS = 8192  # below this, launch overhead > kernel time
_TARGET_GRID_STEPS = 8       # >= 4 steps per TensorCore on a 2-TC (v7x) part


def _cost_kernel(x_ref, y_ref, z_ref):
    # z = -sin(x^2) * cos(3 y^2) * exp(-x^2 y^2) - exp(-(x+y)^2)
    # (x*y)^2 is computed as x2*y2 to reuse x2/y2 (VALU-bound inner loop).
    x = x_ref[...]
    y = y_ref[...]
    x2 = x * x
    y2 = y * y
    s = x + y
    z = (-jnp.sin(x2) * jnp.cos(3.0 * y2) * jnp.exp(-(x2 * y2))
         - jnp.exp(-(s * s)))
    z_ref[...] = z.astype(z_ref.dtype)


def _cost_formula(x, y):
    """Pure-JAX fast path (same math as the kernel)."""
    x2 = x * x
    y2 = y * y
    s = x + y
    return (-jnp.sin(x2) * jnp.cos(3.0 * y2) * jnp.exp(-(x2 * y2))
            - jnp.exp(-(s * s)))


def _round_up(v: int, m: int) -> int:
    return ((v + m - 1) // m) * m


def _max_tile_rows(itemsize: int) -> int:
    """Per-generation cap on tile rows (tile bytes = rows * 128 * itemsize)."""
    try:
        kind = jax.devices()[0].device_kind.lower()
    except Exception:  # pragma: no cover - defensive; fall back to safe cap
        kind = ""
    if ("v6" in kind) or ("v7" in kind):
        # 32 MiB default scoped VMEM: 4 MiB/operand * 3 arrays * 2 bufs = 24 MiB
        # (also well under v7x's 64 MiB physical VMEM).
        budget_bytes = 4 << 20
    else:
        # v5e and older: 16 MiB default scoped VMEM -> 2 MiB/operand (12 MiB).
        budget_bytes = 2 << 20
    return max(8, budget_bytes // (_LANE * itemsize))


def cost_func_pallas(x: jax.Array, y: jax.Array) -> jax.Array:
    """Elementwise cost_func; matches SimpleModel.forward for scalar x, y."""
    dtype = jnp.result_type(x, y)
    x = jnp.asarray(x, dtype)
    y = jnp.asarray(y, dtype)
    x, y = jnp.broadcast_arrays(x, y)
    out_shape = x.shape
    n = x.size

    # Tiny inputs (the canonical SimpleModel call is scalar x, y): the Pallas
    # launch + pad + slice is pure fixed overhead; let XLA fuse the formula.
    if n < _FAST_PATH_MAX_ELEMS:
        return _cost_formula(x, y)

    # Lane-dense 2-D slab.  Pad only if numel is not already a multiple of 128.
    pad = (-n) % _LANE
    xf = jnp.reshape(x, (-1,))
    yf = jnp.reshape(y, (-1,))
    if pad:
        xf = jnp.pad(xf, (0, pad))
        yf = jnp.pad(yf, (0, pad))
    rows = xf.size // _LANE
    x2d = jnp.reshape(xf, (rows, _LANE))
    y2d = jnp.reshape(yf, (rows, _LANE))

    itemsize = jnp.dtype(dtype).itemsize
    # Row multiple keeping sublane packing clean (8 f32, 16 bf16, 32 int8/fp8).
    row_mult = 8 * max(1, 4 // itemsize)
    max_rows = _round_up(_max_tile_rows(itemsize), row_mult)

    # Tile sizing: per-generation VMEM cap, and aim for >= _TARGET_GRID_STEPS
    # grid steps so both v7x TensorCores get >= 4 steps each with
    # DMA/compute overlap; never exceed the (sublane-rounded) slab height.
    tr = min(max_rows, _round_up(pl.cdiv(rows, _TARGET_GRID_STEPS), row_mult))
    tr = max(row_mult, min(tr, _round_up(rows, row_mult)))
    grid = (pl.cdiv(rows, tr),)

    n_pad = rows * _LANE
    cost = pl.CostEstimate(
        flops=15 * n_pad,              # muls/adds per element
        transcendentals=4 * n_pad,     # sin, cos, exp, exp
        bytes_accessed=3 * n_pad * itemsize,
    )

    z2d = pl.pallas_call(
        _cost_kernel,
        out_shape=jax.ShapeDtypeStruct((rows, _LANE), dtype),
        grid=grid,
        in_specs=[
            pl.BlockSpec((tr, _LANE), lambda i: (i, 0)),
            pl.BlockSpec((tr, _LANE), lambda i: (i, 0)),
        ],
        out_specs=pl.BlockSpec((tr, _LANE), lambda i: (i, 0)),
        compiler_params=pltpu.CompilerParams(
            dimension_semantics=("parallel",)),
        cost_estimate=cost,
    )(x2d, y2d)

    zf = jnp.reshape(z2d, (-1,))
    if pad:
        zf = zf[:n]
    return jnp.reshape(zf, out_shape)


# TODO(synk): SimpleModel.process() (optimizer.zero_grad / z.backward /
# optimizer.step) is a training loop, not part of the forward pass, and is
# not implemented here.


if __name__ == "__main__":
    key = jax.random.PRNGKey(0)
    kx, ky = jax.random.split(key)

    # Scalar parameters, exactly like SimpleModel(x, y).forward()
    # (hits the pure-JAX fast path).
    x0 = jax.random.uniform(kx, (), jnp.float32, minval=-2.0, maxval=2.0)
    y0 = jax.random.uniform(ky, (), jnp.float32, minval=-2.0, maxval=2.0)
    z0 = jax.block_until_ready(cost_func_pallas(x0, y0))

    # Batched grid of (x, y) points, as used when visualizing the cost
    # surface (hits the Pallas path: rows=512, 8 grid steps).
    xg = jax.random.uniform(kx, (256, 256), jnp.float32, minval=-2.0, maxval=2.0)
    yg = jax.random.uniform(ky, (256, 256), jnp.float32, minval=-2.0, maxval=2.0)
    zg = jax.block_until_ready(cost_func_pallas(xg, yg))

    def cost_ref(x, y):
        return (-jnp.sin(x * x) * jnp.cos(3.0 * y * y)
                * jnp.exp(-(x * y) * (x * y))
                - jnp.exp(-(x + y) * (x + y)))

    assert z0.shape == () and z0.dtype == x0.dtype
    assert zg.shape == xg.shape and zg.dtype == xg.dtype
    assert jnp.allclose(z0, cost_ref(x0, y0), atol=1e-5, rtol=1e-5)
    assert jnp.allclose(zg, cost_ref(xg, yg), atol=1e-5, rtol=1e-5)

    print("KERNEL_OK")
</pallas_src>

<mosaic_0001>
module attributes {stable_mosaic.version = 11 : i64} {
  func.func @_cost_kernel(%arg0: i32, %arg1: memref<64x128xf32, #tpu.memory_space<vmem>>, %arg2: memref<64x128xf32, #tpu.memory_space<vmem>>, %arg3: memref<64x128xf32, #tpu.memory_space<vmem>>) attributes {dimension_semantics = [#tpu.dimension_semantics<parallel>], iteration_bounds = array<i64: 8>, scalar_prefetch = 0 : i64, scratch_operands = 0 : i64, tpu.core_type = #tpu.core_type<tc>, window_params = [{transform_indices = @transform_0, window_bounds = array<i64: 64, 128>}, {transform_indices = @transform_1, window_bounds = array<i64: 64, 128>}, {transform_indices = @transform_2, window_bounds = array<i64: 64, 128>}]} {
    %c0 = arith.constant 0 : index
    %c0_0 = arith.constant 0 : index
    %0 = vector.load %arg1[%c0, %c0_0] : memref<64x128xf32, #tpu.memory_space<vmem>>, vector<64x128xf32>
    %c0_1 = arith.constant 0 : index
    %c0_2 = arith.constant 0 : index
    %1 = vector.load %arg2[%c0_1, %c0_2] : memref<64x128xf32, #tpu.memory_space<vmem>>, vector<64x128xf32>
    %2 = arith.mulf %0, %0 : vector<64x128xf32>
    %3 = arith.mulf %1, %1 : vector<64x128xf32>
    %4 = arith.addf %0, %1 : vector<64x128xf32>
    %5 = math.sin %2 : vector<64x128xf32>
    %cst = arith.constant 0.000000e+00 : f32
    %6 = vector.broadcast %cst : f32 to vector<64x128xf32>
    %7 = arith.subf %6, %5 : vector<64x128xf32>
    %cst_3 = arith.constant 3.000000e+00 : f32
    %8 = vector.broadcast %cst_3 : f32 to vector<64x128xf32>
    %9 = arith.mulf %8, %3 : vector<64x128xf32>
    %10 = math.cos %9 : vector<64x128xf32>
    %11 = arith.mulf %7, %10 : vector<64x128xf32>
    %12 = arith.mulf %2, %3 : vector<64x128xf32>
    %cst_4 = arith.constant 0.000000e+00 : f32
    %13 = vector.broadcast %cst_4 : f32 to vector<64x128xf32>
    %14 = arith.subf %13, %12 : vector<64x128xf32>
    %15 = math.exp %14 : vector<64x128xf32>
    %16 = arith.mulf %11, %15 : vector<64x128xf32>
    %17 = arith.mulf %4, %4 : vector<64x128xf32>
    %cst_5 = arith.constant 0.000000e+00 : f32
    %18 = vector.broadcast %cst_5 : f32 to vector<64x128xf32>
    %19 = arith.subf %18, %17 : vector<64x128xf32>
    %20 = math.exp %19 : vector<64x128xf32>
    %21 = arith.subf %16, %20 : vector<64x128xf32>
    %c0_6 = arith.constant 0 : index
    %c0_7 = arith.constant 0 : index
    %22 = vector.load %arg3[%c0_6, %c0_7] : memref<64x128xf32, #tpu.memory_space<vmem>>, vector<64x128xf32>
    tpu.vector_store %arg3[%c0_6, %c0_7], %21 {strides = array<i32>} : memref<64x128xf32, #tpu.memory_space<vmem>>, vector<64x128xf32>,
    return
  }
  func.func @transform_0(%arg0: i32) -> (i32, i32) {
    %c0_i32 = arith.constant 0 : i32
    %c0_i32_0 = arith.constant 0 : i32
    return %arg0, %c0_i32 : i32, i32
  }
  func.func @transform_1(%arg0: i32) -> (i32, i32) {
    %c0_i32 = arith.constant 0 : i32
    %c0_i32_0 = arith.constant 0 : i32
    return %arg0, %c0_i32 : i32, i32
  }
  func.func @transform_2(%arg0: i32) -> (i32, i32) {
    %c0_i32 = arith.constant 0 : i32
    %c0_i32_0 = arith.constant 0 : i32
    return %arg0, %c0_i32 : i32, i32
  }
}

</mosaic_0001>

<llo_original>
// kernel: tpu_custom_call.1
$region0: #{tpu_custom_call.1}
  #allocation0 [shape = 'u32[]', space=smem, size = 0x4, offset = 0x4, fixed_abs, tag = 'smem constant byte address 0x4 - core index']
  #allocation1 [shape = 'u32[144,128]{1,0:T(1,128)}', space=vmem, size = 0x12000, scoped, tag = 'internal scratch']
  %s0 = inlined_call_operand.hbm [shape: f32[512,128], index: 0, kind: input, shape index: {}]
  %s1 = inlined_call_operand.hbm [shape: f32[512,128], index: 1, kind: input, shape index: {}]
  %s2 = inlined_call_operand.hbm [shape: f32[512,128], index: 2, kind: output, shape index: {}]
  %s3 = sld [smem:[#allocation0]]
  $region49: #{tpu_custom_call.1} parent=0
    _
  %s5 = ssub.s32 1, %s3
  %s6 = scalar_select 0, %s5, %s3
  $region1: #{tpu_custom_call.1} parent=0
    #allocation2 [shape = 'u8[65536]{0}', space=vmem, size = 0x10000, scoped, tag = 'input window, operand 0']
    #allocation3 [shape = 's32[2]{0}', space=sflag, size = 0x8, scoped, tag = 'scoped memory for tpu_custom_call.1']
    #allocation4 [shape = 's32[2]{0}', space=sflag, size = 0x8, scoped, tag = 'scoped memory for tpu_custom_call.1']
    #allocation5 [shape = 'u8[65536]{0}', space=vmem, size = 0x10000, scoped, tag = 'input window, operand 1']
    #allocation6 [shape = 's32[2]{0}', space=sflag, size = 0x8, scoped, tag = 'scoped memory for tpu_custom_call.1']
    #allocation7 [shape = 'u8[65536]{0}', space=vmem, size = 0x10000, scoped, tag = 'output window, operand 0']
    %7 = vsyncpa [#allocation3], 0
    %s8 = scalar_lea.sflag [#allocation3], 1
    %9 = vsyncpa %s8, 0
    %10 = vsyncpa [#allocation6], 0
    %s11 = scalar_lea.sflag [#allocation6], 1
    %12 = vsyncpa %s11, 0
    %13 = vsyncpa [#allocation4], 0
    %s14 = scalar_lea.sflag [#allocation4], 1
    %15 = vsyncpa %s14, 0
    loop: start=0, step=1, limit=10
    $region2: #{tpu_custom_call.1} parent=1 // loop_pre_header
      _
    $region3: #{tpu_custom_call.1} parent=1 // loop_header
      %s17 = sphi 0, %s21
      %p18 = scmp.ge.s32.totalorder %s17, 10
      %s27 = sphi 0, %s29
      %s30 = sphi 0, %s27
      %s31 = sphi 0, %s30
      %s47 = sphi 0, %s31
      %s53 = sphi 0, %s55
      %s56 = sphi 0, %s53
      %s57 = sphi 0, %s56
      %s73 = sphi 0, %s57
      %s79 = sphi 0, %s81
      %s82 = sphi 0, %s79
      %s83 = sphi 0, %s82
      %s99 = sphi 0, %s83
    $region4: #{tpu_custom_call.1} parent=1 // loop_header_branch
      %20 = sbr.rel (%p18) target = $region8
    $region5: #{tpu_custom_call.1} parent=1 // loop_body
      %s22 = ssub.s32 %s17, 1
      %s23 = ssub.s32 %s17, 2
      %s24 = sadd.s32 %s17, 1
      %s25 = ssub.s32 %s17, %s24
      %p26 = scmp.eq.s32.totalorder %s25, 0
      %s28 = sadd.s32 %s27, 1
      %s29 = scalar_select %p26, %s27, %s28
      %p32 = pneg %p26
      %p33 = scmp.eq.s32.totalorder %s17, 7
      %p34 = por %p32, %p33
      %p35 = scmp.ne.s32.totalorder %s27, %s30
      %p36 = scmp.eq.s32.totalorder %s17, 0
      %p37 = por %p35, %p36
      %p38 = scmp.ne.s32.totalorder %s27, %s30
      %p39 = scmp.eq.s32.totalorder %s22, 7
      %p40 = por %p38, %p39
      %p41 = scmp.ne.s32.totalorder %s30, %s31
      %p42 = scmp.eq.s32.totalorder %s22, 0
      %p43 = por %p41, %p42
      %p44 = scmp.ne.s32.totalorder %s30, %s31
      %p45 = scmp.eq.s32.totalorder %s23, 7
      %p46 = por %p44, %p45
      %p48 = scmp.ne.s32.totalorder %s31, %s47
      %p49 = scmp.eq.s32.totalorder %s23, 0
      %p50 = por %p48, %p49
      %s51 = ssub.s32 %s17, %s24
      %p52 = scmp.eq.s32.totalorder %s51, 0
      %s54 = sadd.s32 %s53, 1
      %s55 = scalar_select %p52, %s53, %s54
      %p58 = pneg %p52
      %p59 = scmp.eq.s32.totalorder %s17, 7
      %p60 = por %p58, %p59
      %p61 = scmp.ne.s32.totalorder %s53, %s56
      %p62 = scmp.eq.s32.totalorder %s17, 0
      %p63 = por %p61, %p62
      %p64 = scmp.ne.s32.totalorder %s53, %s56
      %p65 = scmp.eq.s32.totalorder %s22, 7
      %p66 = por %p64, %p65
      %p67 = scmp.ne.s32.totalorder %s56, %s57
      %p68 = scmp.eq.s32.totalorder %s22, 0
      %p69 = por %p67, %p68
      %p70 = scmp.ne.s32.totalorder %s56, %s57
      %p71 = scmp.eq.s32.totalorder %s23, 7
      %p72 = por %p70, %p71
      %p74 = scmp.ne.s32.totalorder %s57, %s73
      %p75 = scmp.eq.s32.totalorder %s23, 0
      %p76 = por %p74, %p75
      %s77 = ssub.s32 %s17, %s24
      %p78 = scmp.eq.s32.totalorder %s77, 0
      %s80 = sadd.s32 %s79, 1
      %s81 = scalar_select %p78, %s79, %s80
      %p84 = pneg %p78
      %p85 = scmp.eq.s32.totalorder %s17, 7
      %p86 = por %p84, %p85
      %p87 = scmp.ne.s32.totalorder %s79, %s82
      %p88 = scmp.eq.s32.totalorder %s17, 0
      %p89 = por %p87, %p88
      %p90 = scmp.ne.s32.totalorder %s79, %s82
      %p91 = scmp.eq.s32.totalorder %s22, 7
      %p92 = por %p90, %p91
      %p93 = scmp.ne.s32.totalorder %s82, %s83
      %p94 = scmp.eq.s32.totalorder %s22, 0
      %p95 = por %p93, %p94
      %p96 = scmp.ne.s32.totalorder %s82, %s83
      %p97 = scmp.eq.s32.totalorder %s23, 7
      %p98 = por %p96, %p97
      %p100 = scmp.ne.s32.totalorder %s83, %s99
      %p101 = scmp.eq.s32.totalorder %s23, 0
      %p102 = por %p100, %p101
      %p103 = scmp.le.s32.totalorder 1, %s17
      %p104 = scmp.lt.s32.totalorder %s17, 9
      %p105 = pnand %p103, %p104
      %p106 = pneg %p105
      // Predicated region
      $region9: #{tpu_custom_call.1} parent=5 // pred_check
        _
      $region10: #{tpu_custom_call.1} parent=5 // pred_check_branch
        %108 = sbr.rel (%p105) target = $region12
      $region11: #{tpu_custom_call.1} parent=5 // pred_region
        %s109 = ssub.s32 %s17, 1
      $region12: #{tpu_custom_call.1} parent=5 // pred_fallthru
        _
      %p110 = scmp.lt.s32.totalorder %s17, 8
      // Predicated region
      $region13: #{tpu_custom_call.1} parent=5 // pred_check
        %p111 = pneg %p110
      $region14: #{tpu_custom_call.1} parent=5 // pred_check_branch
        %113 = sbr.rel (%p111) target = $region16
      $region15: #{tpu_custom_call.1} parent=5 // pred_region
        // Predicated region
        $region17: #{tpu_custom_call.1} parent=15 // pred_check
          %p114 = pneg %p37
        $region18: #{tpu_custom_call.1} parent=15 // pred_check_branch
          %116 = sbr.rel (%p114) target = $region20
        $region19: #{tpu_custom_call.1} parent=15 // pred_region
          %s117 = sand.u32 %s27, 1
          %s118 = scalar_lea.sflag [#allocation3], %s117
          %s119 = sand.u32 %s27, 1
          %s120 = smul.addr %s119, 64
          %s121 = scalar_lea.vmem [#allocation2], %s120
          %s122 = smul.u32 8, %s17
          %s124 = ssub.s32 1024, 1024
          %125 = vsyncadd %s118, %s124
          %s126 = smul.addr %s122, 128
          %s127 = scalar_lea.hbm %s0, %s126
          %s128 = sshll.u32 %s121, 4
          %s129 = int_to_ptr.vmem [resolvable:$true] %s128
          %134 = dma.hbm_to_vmem [thread:$0]  %s127, 1024, %s129, %s118, 128, 128, 8
        $region20: #{tpu_custom_call.1} parent=15 // pred_fallthru
          _
        // Predicated region
        $region21: #{tpu_custom_call.1} parent=15 // pred_check
          %p135 = pneg %p63
        $region22: #{tpu_custom_call.1} parent=15 // pred_check_branch
          %137 = sbr.rel (%p135) target = $region24
        $region23: #{tpu_custom_call.1} parent=15 // pred_region
          %s138 = sand.u32 %s53, 1
          %s139 = scalar_lea.sflag [#allocation6], %s138
          %s140 = sand.u32 %s53, 1
          %s141 = smul.addr %s140, 64
          %s142 = scalar_lea.vmem [#allocation5], %s141
          %s143 = smul.u32 8, %s17
          %s145 = ssub.s32 1024, 1024
          %146 = vsyncadd %s139, %s145
          %s147 = smul.addr %s143, 128
          %s148 = scalar_lea.hbm %s1, %s147
          %s149 = sshll.u32 %s142, 4
          %s150 = int_to_ptr.vmem [resolvable:$true] %s149
          %155 = dma.hbm_to_vmem [thread:$0]  %s148, 1024, %s150, %s139, 128, 128, 8
        $region24: #{tpu_custom_call.1} parent=15 // pred_fallthru
          _
      $region16: #{tpu_custom_call.1} parent=5 // pred_fallthru
        _
      %p156 = scmp.le.s32.totalorder 1, %s17
      %p157 = scmp.lt.s32.totalorder %s17, 9
      %p158 = pnand %p156, %p157
      %p159 = pneg %p158
      // Predicated region
      $region25: #{tpu_custom_call.1} parent=5 // pred_check
        _
      $region26: #{tpu_custom_call.1} parent=5 // pred_check_branch
        %161 = sbr.rel (%p158) target = $region28
      $region27: #{tpu_custom_call.1} parent=5 // pred_region
        %s162 = ssub.s32 %s17, 1
        %s163 = sand.u32 %s30, 1
        %s164 = scalar_lea.sflag [#allocation3], %s163
        %s165 = sand.u32 %s30, 1
        %s166 = smul.addr %s165, 64
        %s167 = scalar_lea.vmem [#allocation2], %s166
        // Predicated region
        $region29: #{tpu_custom_call.1} parent=27 // pred_check
          %p168 = pneg %p43
        $region30: #{tpu_custom_call.1} parent=27 // pred_check_branch
          %170 = sbr.rel (%p168) target = $region32
        $region31: #{tpu_custom_call.1} parent=27 // pred_region
          %171 = dma.done %s164, 1024
        $region32: #{tpu_custom_call.1} parent=27 // pred_fallthru
          _
        %s172 = sand.u32 %s56, 1
        %s173 = scalar_lea.sflag [#allocation6], %s172
        %s174 = sand.u32 %s56, 1
        %s175 = smul.addr %s174, 64
        %s176 = scalar_lea.vmem [#allocation5], %s175
        // Predicated region
        $region33: #{tpu_custom_call.1} parent=27 // pred_check
          %p177 = pneg %p69
        $region34: #{tpu_custom_call.1} parent=27 // pred_check_branch
          %179 = sbr.rel (%p177) target = $region36
        $region35: #{tpu_custom_call.1} parent=27 // pred_region
          %180 = dma.done %s173, 1024
        $region36: #{tpu_custom_call.1} parent=27 // pred_fallthru
          _
        %s181 = sand.u32 %s30, 1
        %s182 = scalar_lea.sflag [#allocation3], %s181
        %s183 = sand.u32 %s30, 1
        %s184 = smul.addr %s183, 64
        %s185 = scalar_lea.vmem [#allocation2], %s184
        %p186 = pneg %p43
        %p187 = pneg %p40
        %s188 = sand.u32 %s56, 1
        %s189 = scalar_lea.sflag [#allocation6], %s188
        %s190 = sand.u32 %s56, 1
        %s191 = smul.addr %s190, 64
        %s192 = scalar_lea.vmem [#allocation5], %s191
        %p193 = pneg %p69
        %p194 = pneg %p66
        %p195 = pneg %p95
        %p196 = pneg %p92
        %s197 = sand.u32 %s82, 1
        %s198 = scalar_lea.sflag [#allocation4], %s197
        %s199 = sand.u32 %s82, 1
        %s200 = smul.addr %s199, 64
        %s201 = scalar_lea.vmem [#allocation7], %s200
        %s202 = smul.u32 8, %s22
        %s203 = smul.u32 8, %s22
        %s204 = smul.u32 8, %s22
        %v205 = vld [vmem:[%s167] sm:$0xff]
        %v206 = vld [vmem:[%s167 + $0x8] sm:$0xff]
        %v207 = vld [vmem:[%s167 + $0x10] sm:$0xff]
        %v208 = vld [vmem:[%s167 + $0x18] sm:$0xff]
        %v209 = vld [vmem:[%s167 + $0x20] sm:$0xff]
        %v210 = vld [vmem:[%s167 + $0x28] sm:$0xff]
        %v211 = vld [vmem:[%s167 + $0x30] sm:$0xff]
        %v212 = vld [vmem:[%s167 + $0x38] sm:$0xff]
        %v213 = vld [vmem:[%s176] sm:$0xff]
        %v214 = vld [vmem:[%s176 + $0x8] sm:$0xff]
        %v215 = vld [vmem:[%s176 + $0x10] sm:$0xff]
        %v216 = vld [vmem:[%s176 + $0x18] sm:$0xff]
        %v217 = vld [vmem:[%s176 + $0x20] sm:$0xff]
        %v218 = vld [vmem:[%s176 + $0x28] sm:$0xff]
        %v219 = vld [vmem:[%s176 + $0x30] sm:$0xff]
        %v220 = vld [vmem:[%s176 + $0x38] sm:$0xff]
        %v221 = vmul.f32 %v205, %v205
        %v222 = vmul.f32 %v206, %v206
        %v223 = vmul.f32 %v207, %v207
        %v224 = vmul.f32 %v208, %v208
        %v225 = vmul.f32 %v209, %v209
        %v226 = vmul.f32 %v210, %v210
        %v227 = vmul.f32 %v211, %v211
        %v228 = vmul.f32 %v212, %v212
        %v229 = vmul.f32 %v213, %v213
        %v230 = vmul.f32 %v214, %v214
        %v231 = vmul.f32 %v215, %v215
        %v232 = vmul.f32 %v216, %v216
        %v233 = vmul.f32 %v217, %v217
        %v234 = vmul.f32 %v218, %v218
        %v235 = vmul.f32 %v219, %v219
        %v236 = vmul.f32 %v220, %v220
        %v237 = vadd.f32 %v205, %v213
        %v238 = vadd.f32 %v206, %v214
        %v239 = vadd.f32 %v207, %v215
        %v240 = vadd.f32 %v208, %v216
        %v241 = vadd.f32 %v209, %v217
        %v242 = vadd.f32 %v210, %v218
        %v243 = vadd.f32 %v211, %v219
        %v244 = vadd.f32 %v212, %v220
        %v245 = vand.u32 2147483647, %v221
        %vm246 = vcmp.le.f32.partialorder %v245, 0.7853982
        %vm247 = vcmp.lt.s32.totalorder %v221, 0
        %v248 = vand.u32 %v221, 2139095040
        %v249 = vshrl.u32 %v248, 23
        %v250 = vsub.s32 %v249, 127
        %v251 = vand.u32 2147483647, %v221
        %v252 = vand.u32 %v251, 8388607
        %v253 = vor.u32 %v252, 8388608
        %v254 = vsub.s32 0, %v253
        %v255 = vadd.s32 %v250, 1
        %vm256 = vcmp.gt.s32.totalorder %v255, 0
        %v257 = vsel %vm256, %v255, 0
        %v258 = vshrl.u32 %v257, 5
        %v259 = vand.u32 %v257, 31
        %v260 = vsub.s32 32, %v259
        %v261 = vshrl.u32 683565275, %v260
        %v262 = vshll.u32 683565275, %v259
        %v263 = vshrl.u32 2475754826, %v260
        %v264 = vor.u32 %v262, %v263
        %v265 = vshll.u32 2475754826, %v259
        %v266 = vshrl.u32 2131351028, %v260
        %v267 = vor.u32 %v265, %v266
        %v268 = vshll.u32 2131351028, %v259
        %v269 = vshrl.u32 2102212464, %v260
        %v270 = vor.u32 %v268, %v269
        %v271 = vshll.u32 2102212464, %v259
        %v272 = vshrl.u32 920167782, %v260
        %v273 = vor.u32 %v271, %v272
        %v274 = vshll.u32 920167782, %v259
        %v275 = vshrl.u32 1326507024, %v260
        %v276 = vor.u32 %v274, %v275
        %vm277 = vcmp.lt.s32.totalorder %v258, 1
        %vm278 = vcmp.lt.s32.totalorder %v258, 2
        %vm279 = vcmp.lt.s32.totalorder %v258, 3
        %vm280 = vcmp.lt.s32.totalorder %v258, 4
        %v281 = vsel %vm277, %v261, %v264
        %v282 = vsel %vm280, %v270, 2102212464
        %v283 = vsel %vm279, %v267, %v282
        %v284 = vsel %vm278, %v281, %v283
        %v285 = vsel %vm277, %v264, %v267
        %v286 = vsel %vm280, %v273, 920167782
        %v287 = vsel %vm279, %v270, %v286
        %v288 = vsel %vm278, %v285, %v287
        %v289 = vsel %vm277, %v267, %v270
        %v290 = vsel %vm280, %v276, 1326507024
        %v291 = vsel %vm279, %v273, %v290
        %v292 = vsel %vm278, %v289, %v291
        %v293 = vshll.u32 %v253, 8
        %v294 = vmul.u32.u64.compose %v293, %v292
        %v295 = vextract.low.u32 %v294
        %v296 = vextract.high.u32 %v294
        %v297 = vmul.u32.u64.compose %v293, %v288
        %v298 = vextract.low.u32 %v297
        %v299 = vextract.high.u32 %v297
        %v300 = vmul.u32 %v293, %v284
        %v301 = vadd.s32 %v296, %v298
        %vm302 = vc.u32 %v296, %v298
        %v303 = vadd.s32 %v299, 1
        %v304 = vsel %vm302, %v303, %v299
        %v305 = vadd.s32 %v300, %v304
        %v306 = vadd.s32 %v305, 536870912
        %v307 = vshrl.u32 %v306, 30
        %v308 = vshll.u32 %v307, 30
        %v309 = vsub.s32 %v305, %v308
        %vm310 = vcmp.lt.s32.totalorder %v309, 0
        %v311 = vsub.s32 0, %v309
        %v312 = vsel %vm310, %v311, %v309
        %v313 = vclz %v312
        %v314 = vsub.s32 %v313, 2
        %vm315 = vcmp.gt.s32.totalorder 0, %v314
        %v316 = vsel %vm315, 0, %v314
        %v317 = vsub.s32 32, %v316
        %v318 = vshll.u32 %v309, %v316
        %v319 = vshrl.u32 %v301, %v317
        %v320 = vor.u32 %v318, %v319
        %v321 = vsub.s32 4294967266, %v316
        %v322 = vadd.s32 %v321, 127
        %v323 = vshll.u32 %v322, 23
        %v324 = vor.u32 4788187, %v323
        %v325 = vand.u32 2147483647, %v324
        %v327 = vcvt.s32.f32 %v320
        %v328 = vmul.f32 %v327, %v325
        %v329 = vxor.u32 %v328, 2147483648
        %v330 = vsel %vm247, %v329, %v328
        %v331 = vsub.s32 4, %v307
        %v332 = vsel %vm247, %v331, %v307
        %v333 = vsel %vm246, %v221, %v330
        %v334 = vsel %vm246, 0, %v332
        %v335 = vcosq.f32.pop %v333
        %v336 = vsinq.f32.pop %v333
        %vm337 = vweird.f32 %v221
        %v338 = vadd.s32 %v334, 3
        %v339 = vand.u32 %v338, 3
        %vm340 = vcmp.lt.s32.totalorder %v339, 2
        %vm341 = vcmp.eq.s32.totalorder %v339, 0
        %v342 = vxor.u32 %v336, 2147483648
        %v343 = vsel %vm341, %v335, %v342
        %vm344 = vcmp.eq.s32.totalorder %v339, 2
        %v345 = vxor.u32 %v335, 2147483648
        %v346 = vsel %vm344, %v345, %v336
        %v347 = vsel %vm340, %v343, %v346
        %v348 = vsel %vm337, nan, %v347
        %v349 = vand.u32 2147483647, %v222
        %vm350 = vcmp.le.f32.partialorder %v349, 0.7853982
        %vm351 = vcmp.lt.s32.totalorder %v222, 0
        %v352 = vand.u32 %v222, 2139095040
        %v353 = vshrl.u32 %v352, 23
        %v354 = vsub.s32 %v353, 127
        %v355 = vand.u32 2147483647, %v222
        %v356 = vand.u32 %v355, 8388607
        %v357 = vor.u32 %v356, 8388608
        %v358 = vsub.s32 0, %v357
        %v359 = vadd.s32 %v354, 1
        %vm360 = vcmp.gt.s32.totalorder %v359, 0
        %v361 = vsel %vm360, %v359, 0
        %v362 = vshrl.u32 %v361, 5
        %v363 = vand.u32 %v361, 31
        %v364 = vsub.s32 32, %v363
        %v365 = vshrl.u32 683565275, %v364
        %v366 = vshll.u32 683565275, %v363
        %v367 = vshrl.u32 2475754826, %v364
        %v368 = vor.u32 %v366, %v367
        %v369 = vshll.u32 2475754826, %v363
        %v370 = vshrl.u32 2131351028, %v364
        %v371 = vor.u32 %v369, %v370
        %v372 = vshll.u32 2131351028, %v363
        %v373 = vshrl.u32 2102212464, %v364
        %v374 = vor.u32 %v372, %v373
        %v375 = vshll.u32 2102212464, %v363
        %v376 = vshrl.u32 920167782, %v364
        %v377 = vor.u32 %v375, %v376
        %v378 = vshll.u32 920167782, %v363
        %v379 = vshrl.u32 1326507024, %v364
        %v380 = vor.u32 %v378, %v379
        %vm381 = vcmp.lt.s32.totalorder %v362, 1
        %vm382 = vcmp.lt.s32.totalorder %v362, 2
        %vm383 = vcmp.lt.s32.totalorder %v362, 3
        %vm384 = vcmp.lt.s32.totalorder %v362, 4
        %v385 = vsel %vm381, %v365, %v368
        %v386 = vsel %vm384, %v374, 2102212464
        %v387 = vsel %vm383, %v371, %v386
        %v388 = vsel %vm382, %v385, %v387
        %v389 = vsel %vm381, %v368, %v371
        %v390 = vsel %vm384, %v377, 920167782
        %v391 = vsel %vm383, %v374, %v390
        %v392 = vsel %vm382, %v389, %v391
        %v393 = vsel %vm381, %v371, %v374
        %v394 = vsel %vm384, %v380, 1326507024
        %v395 = vsel %vm383, %v377, %v394
        %v396 = vsel %vm382, %v393, %v395
        %v397 = vshll.u32 %v357, 8
        %v398 = vmul.u32.u64.compose %v397, %v396
        %v399 = vextract.low.u32 %v398
        %v400 = vextract.high.u32 %v398
        %v401 = vmul.u32.u64.compose %v397, %v392
        %v402 = vextract.low.u32 %v401
        %v403 = vextract.high.u32 %v401
        %v404 = vmul.u32 %v397, %v388
        %v405 = vadd.s32 %v400, %v402
        %vm406 = vc.u32 %v400, %v402
        %v407 = vadd.s32 %v403, 1
        %v408 = vsel %vm406, %v407, %v403
        %v409 = vadd.s32 %v404, %v408
        %v410 = vadd.s32 %v409, 536870912
        %v411 = vshrl.u32 %v410, 30
        %v412 = vshll.u32 %v411, 30
        %v413 = vsub.s32 %v409, %v412
        %vm414 = vcmp.lt.s32.totalorder %v413, 0
        %v415 = vsub.s32 0, %v413
        %v416 = vsel %vm414, %v415, %v413
        %v417 = vclz %v416
        %v418 = vsub.s32 %v417, 2
        %vm419 = vcmp.gt.s32.totalorder 0, %v418
        %v420 = vsel %vm419, 0, %v418
        %v421 = vsub.s32 32, %v420
        %v422 = vshll.u32 %v413, %v420
        %v423 = vshrl.u32 %v405, %v421
        %v424 = vor.u32 %v422, %v423
        %v425 = vsub.s32 4294967266, %v420
        %v426 = vadd.s32 %v425, 127
        %v427 = vshll.u32 %v426, 23
        %v428 = vor.u32 4788187, %v427
        %v429 = vand.u32 2147483647, %v428
        %v431 = vcvt.s32.f32 %v424
        %v432 = vmul.f32 %v431, %v429
        %v433 = vxor.u32 %v432, 2147483648
        %v434 = vsel %vm351, %v433, %v432
        %v435 = vsub.s32 4, %v411
        %v436 = vsel %vm351, %v435, %v411
        %v437 = vsel %vm350, %v222, %v434
        %v438 = vsel %vm350, 0, %v436
        %v439 = vcosq.f32.pop %v437
        %v440 = vsinq.f32.pop %v437
        %vm441 = vweird.f32 %v222
        %v442 = vadd.s32 %v438, 3
        %v443 = vand.u32 %v442, 3
        %vm444 = vcmp.lt.s32.totalorder %v443, 2
        %vm445 = vcmp.eq.s32.totalorder %v443, 0
        %v446 = vxor.u32 %v440, 2147483648
        %v447 = vsel %vm445, %v439, %v446
        %vm448 = vcmp.eq.s32.totalorder %v443, 2
        %v449 = vxor.u32 %v439, 2147483648
        %v450 = vsel %vm448, %v449, %v440
        %v451 = vsel %vm444, %v447, %v450
        %v452 = vsel %vm441, nan, %v451
        %v453 = vand.u32 2147483647, %v223
        %vm454 = vcmp.le.f32.partialorder %v453, 0.7853982
        %vm455 = vcmp.lt.s32.totalorder %v223, 0
        %v456 = vand.u32 %v223, 2139095040
        %v457 = vshrl.u32 %v456, 23
        %v458 = vsub.s32 %v457, 127
        %v459 = vand.u32 2147483647, %v223
        %v460 = vand.u32 %v459, 8388607
        %v461 = vor.u32 %v460, 8388608
        %v462 = vsub.s32 0, %v461
        %v463 = vadd.s32 %v458, 1
        %vm464 = vcmp.gt.s32.totalorder %v463, 0
        %v465 = vsel %vm464, %v463, 0
        %v466 = vshrl.u32 %v465, 5
        %v467 = vand.u32 %v465, 31
        %v468 = vsub.s32 32, %v467
        %v469 = vshrl.u32 683565275, %v468
        %v470 = vshll.u32 683565275, %v467
        %v471 = vshrl.u32 2475754826, %v468
        %v472 = vor.u32 %v470, %v471
        %v473 = vshll.u32 2475754826, %v467
        %v474 = vshrl.u32 2131351028, %v468
        %v475 = vor.u32 %v473, %v474
        %v476 = vshll.u32 2131351028, %v467
        %v477 = vshrl.u32 2102212464, %v468
        %v478 = vor.u32 %v476, %v477
        %v479 = vshll.u32 2102212464, %v467
        %v480 = vshrl.u32 920167782, %v468
        %v481 = vor.u32 %v479, %v480
        %v482 = vshll.u32 920167782, %v467
        %v483 = vshrl.u32 1326507024, %v468
        %v484 = vor.u32 %v482, %v483
        %vm485 = vcmp.lt.s32.totalorder %v466, 1
        %vm486 = vcmp.lt.s32.totalorder %v466, 2
        %vm487 = vcmp.lt.s32.totalorder %v466, 3
        %vm488 = vcmp.lt.s32.totalorder %v466, 4
        %v489 = vsel %vm485, %v469, %v472
        %v490 = vsel %vm488, %v478, 2102212464
        %v491 = vsel %vm487, %v475, %v490
        %v492 = vsel %vm486, %v489, %v491
        %v493 = vsel %vm485, %v472, %v475
        %v494 = vsel %vm488, %v481, 920167782
        %v495 = vsel %vm487, %v478, %v494
        %v496 = vsel %vm486, %v493, %v495
        %v497 = vsel %vm485, %v475, %v478
        %v498 = vsel %vm488, %v484, 1326507024
        %v499 = vsel %vm487, %v481, %v498
        %v500 = vsel %vm486, %v497, %v499
        %v501 = vshll.u32 %v461, 8
        %v502 = vmul.u32.u64.compose %v501, %v500
        %v503 = vextract.low.u32 %v502
        %v504 = vextract.high.u32 %v502
        %v505 = vmul.u32.u64.compose %v501, %v496
        %v506 = vextract.low.u32 %v505
        %v507 = vextract.high.u32 %v505
        %v508 = vmul.u32 %v501, %v492
        %v509 = vadd.s32 %v504, %v506
        %vm510 = vc.u32 %v504, %v506
        %v511 = vadd.s32 %v507, 1
        %v512 = vsel %vm510, %v511, %v507
        %v513 = vadd.s32 %v508, %v512
        %v514 = vadd.s32 %v513, 536870912
        %v515 = vshrl.u32 %v514, 30
        %v516 = vshll.u32 %v515, 30
        %v517 = vsub.s32 %v513, %v516
        %vm518 = vcmp.lt.s32.totalorder %v517, 0
        %v519 = vsub.s32 0, %v517
        %v520 = vsel %vm518, %v519, %v517
        %v521 = vclz %v520
        %v522 = vsub.s32 %v521, 2
        %vm523 = vcmp.gt.s32.totalorder 0, %v522
        %v524 = vsel %vm523, 0, %v522
        %v525 = vsub.s32 32, %v524
        %v526 = vshll.u32 %v517, %v524
        %v527 = vshrl.u32 %v509, %v525
        %v528 = vor.u32 %v526, %v527
        %v529 = vsub.s32 4294967266, %v524
        %v530 = vadd.s32 %v529, 127
        %v531 = vshll.u32 %v530, 23
        %v532 = vor.u32 4788187, %v531
        %v533 = vand.u32 2147483647, %v532
        %v535 = vcvt.s32.f32 %v528
        %v536 = vmul.f32 %v535, %v533
        %v537 = vxor.u32 %v536, 2147483648
        %v538 = vsel %vm455, %v537, %v536
        %v539 = vsub.s32 4, %v515
        %v540 = vsel %vm455, %v539, %v515
        %v541 = vsel %vm454, %v223, %v538
        %v542 = vsel %vm454, 0, %v540
        %v543 = vcosq.f32.pop %v541
        %v544 = vsinq.f32.pop %v541
        %vm545 = vweird.f32 %v223
        %v546 = vadd.s32 %v542, 3
        %v547 = vand.u32 %v546, 3
        %vm548 = vcmp.lt.s32.totalorder %v547, 2
        %vm549 = vcmp.eq.s32.totalorder %v547, 0
        %v550 = vxor.u32 %v544, 2147483648
        %v551 = vsel %vm549, %v543, %v550
        %vm552 = vcmp.eq.s32.totalorder %v547, 2
        %v553 = vxor.u32 %v543, 2147483648
        %v554 = vsel %vm552, %v553, %v544
        %v555 = vsel %vm548, %v551, %v554
        %v556 = vsel %vm545, nan, %v555
        %v557 = vand.u32 2147483647, %v224
        %vm558 = vcmp.le.f32.partialorder %v557, 0.7853982
        %vm559 = vcmp.lt.s32.totalorder %v224, 0
        %v560 = vand.u32 %v224, 2139095040
        %v561 = vshrl.u32 %v560, 23
        %v562 = vsub.s32 %v561, 127
        %v563 = vand.u32 2147483647, %v224
        %v564 = vand.u32 %v563, 8388607
        %v565 = vor.u32 %v564, 8388608
        %v566 = vsub.s32 0, %v565
        %v567 = vadd.s32 %v562, 1
        %vm568 = vcmp.gt.s32.totalorder %v567, 0
        %v569 = vsel %vm568, %v567, 0
        %v570 = vshrl.u32 %v569, 5
        %v571 = vand.u32 %v569, 31
        %v572 = vsub.s32 32, %v571
        %v573 = vshrl.u32 683565275, %v572
        %v574 = vshll.u32 683565275, %v571
        %v575 = vshrl.u32 2475754826, %v572
        %v576 = vor.u32 %v574, %v575
        %v577 = vshll.u32 2475754826, %v571
        %v578 = vshrl.u32 2131351028, %v572
        %v579 = vor.u32 %v577, %v578
        %v580 = vshll.u32 2131351028, %v571
        %v581 = vshrl.u32 2102212464, %v572
        %v582 = vor.u32 %v580, %v581
        %v583 = vshll.u32 2102212464, %v571
        %v584 = vshrl.u32 920167782, %v572
        %v585 = vor.u32 %v583, %v584
        %v586 = vshll.u32 920167782, %v571
        %v587 = vshrl.u32 1326507024, %v572
        %v588 = vor.u32 %v586, %v587
        %vm589 = vcmp.lt.s32.totalorder %v570, 1
        %vm590 = vcmp.lt.s32.totalorder %v570, 2
        %vm591 = vcmp.lt.s32.totalorder %v570, 3
        %vm592 = vcmp.lt.s32.totalorder %v570, 4
        %v593 = vsel %vm589, %v573, %v576
        %v594 = vsel %vm592, %v582, 2102212464
        %v595 = vsel %vm591, %v579, %v594
        %v596 = vsel %vm590, %v593, %v595
        %v597 = vsel %vm589, %v576, %v579
        %v598 = vsel %vm592, %v585, 920167782
        %v599 = vsel %vm591, %v582, %v598
        %v600 = vsel %vm590, %v597, %v599
        %v601 = vsel %vm589, %v579, %v582
        %v602 = vsel %vm592, %v588, 1326507024
        %v603 = vsel %vm591, %v585, %v602
        %v604 = vsel %vm590, %v601, %v603
        %v605 = vshll.u32 %v565, 8
        %v606 = vmul.u32.u64.compose %v605, %v604
        %v607 = vextract.low.u32 %v606
        %v608 = vextract.high.u32 %v606
        %v609 = vmul.u32.u64.compose %v605, %v600
        %v610 = vextract.low.u32 %v609
        %v611 = vextract.high.u32 %v609
        %v612 = vmul.u32 %v605, %v596
        %v613 = vadd.s32 %v608, %v610
        %vm614 = vc.u32 %v608, %v610
        %v615 = vadd.s32 %v611, 1
        %v616 = vsel %vm614, %v615, %v611
        %v617 = vadd.s32 %v612, %v616
        %v618 = vadd.s32 %v617, 536870912
        %v619 = vshrl.u32 %v618, 30
        %v620 = vshll.u32 %v619, 30
        %v621 = vsub.s32 %v617, %v620
        %vm622 = vcmp.lt.s32.totalorder %v621, 0
        %v623 = vsub.s32 0, %v621
        %v624 = vsel %vm622, %v623, %v621
        %v625 = vclz %v624
        %v626 = vsub.s32 %v625, 2
        %vm627 = vcmp.gt.s32.totalorder 0, %v626
        %v628 = vsel %vm627, 0, %v626
        %v629 = vsub.s32 32, %v628
        %v630 = vshll.u32 %v621, %v628
        %v631 = vshrl.u32 %v613, %v629
        %v632 = vor.u32 %v630, %v631
        %v633 = vsub.s32 4294967266, %v628
        %v634 = vadd.s32 %v633, 127
        %v635 = vshll.u32 %v634, 23
        %v636 = vor.u32 4788187, %v635
        %v637 = vand.u32 2147483647, %v636
        %v639 = vcvt.s32.f32 %v632
        %v640 = vmul.f32 %v639, %v637
        %v641 = vxor.u32 %v640, 2147483648
        %v642 = vsel %vm559, %v641, %v640
        %v643 = vsub.s32 4, %v619
        %v644 = vsel %vm559, %v643, %v619
        %v645 = vsel %vm558, %v224, %v642
        %v646 = vsel %vm558, 0, %v644
        %v647 = vcosq.f32.pop %v645
        %v648 = vsinq.f32.pop %v645
        %vm649 = vweird.f32 %v224
        %v650 = vadd.s32 %v646, 3
        %v651 = vand.u32 %v650, 3
        %vm652 = vcmp.lt.s32.totalorder %v651, 2
        %vm653 = vcmp.eq.s32.totalorder %v651, 0
        %v654 = vxor.u32 %v648, 2147483648
        %v655 = vsel %vm653, %v647, %v654
        %vm656 = vcmp.eq.s32.totalorder %v651, 2
        %v657 = vxor.u32 %v647, 2147483648
        %v658 = vsel %vm656, %v657, %v648
        %v659 = vsel %vm652, %v655, %v658
        %v660 = vsel %vm649, nan, %v659
        %v661 = vand.u32 2147483647, %v225
        %vm662 = vcmp.le.f32.partialorder %v661, 0.7853982
        %vm663 = vcmp.lt.s32.totalorder %v225, 0
        %v664 = vand.u32 %v225, 2139095040
        %v665 = vshrl.u32 %v664, 23
        %v666 = vsub.s32 %v665, 127
        %v667 = vand.u32 2147483647, %v225
        %v668 = vand.u32 %v667, 8388607
        %v669 = vor.u32 %v668, 8388608
        %v670 = vsub.s32 0, %v669
        %v671 = vadd.s32 %v666, 1
        %vm672 = vcmp.gt.s32.totalorder %v671, 0
        %v673 = vsel %vm672, %v671, 0
        %v674 = vshrl.u32 %v673, 5
        %v675 = vand.u32 %v673, 31
        %v676 = vsub.s32 32, %v675
        %v677 = vshrl.u32 683565275, %v676
        %v678 = vshll.u32 683565275, %v675
        %v679 = vshrl.u32 2475754826, %v676
        %v680 = vor.u32 %v678, %v679
        %v681 = vshll.u32 2475754826, %v675
        %v682 = vshrl.u32 2131351028, %v676
        %v683 = vor.u32 %v681, %v682
        %v684 = vshll.u32 2131351028, %v675
        %v685 = vshrl.u32 2102212464, %v676
        %v686 = vor.u32 %v684, %v685
        %v687 = vshll.u32 2102212464, %v675
        %v688 = vshrl.u32 920167782, %v676
        %v689 = vor.u32 %v687, %v688
        %v690 = vshll.u32 920167782, %v675
        %v691 = vshrl.u32 1326507024, %v676
        %v692 = vor.u32 %v690, %v691
        %vm693 = vcmp.lt.s32.totalorder %v674, 1
        %vm694 = vcmp.lt.s32.totalorder %v674, 2
        %vm695 = vcmp.lt.s32.totalorder %v674, 3
        %vm696 = vcmp.lt.s32.totalorder %v674, 4
        %v697 = vsel %vm693, %v677, %v680
        %v698 = vsel %vm696, %v686, 2102212464
        %v699 = vsel %vm695, %v683, %v698
        %v700 = vsel %vm694, %v697, %v699
        %v701 = vsel %vm693, %v680, %v683
        %v702 = vsel %vm696, %v689, 920167782
        %v703 = vsel %vm695, %v686, %v702
        %v704 = vsel %vm694, %v701, %v703
        %v705 = vsel %vm693, %v683, %v686
        %v706 = vsel %vm696, %v692, 1326507024
        %v707 = vsel %vm695, %v689, %v706
        %v708 = vsel %vm694, %v705, %v707
        %v709 = vshll.u32 %v669, 8
        %v710 = vmul.u32.u64.compose %v709, %v708
        %v711 = vextract.low.u32 %v710
        %v712 = vextract.high.u32 %v710
        %v713 = vmul.u32.u64.compose %v709, %v704
        %v714 = vextract.low.u32 %v713
        %v715 = vextract.high.u32 %v713
        %v716 = vmul.u32 %v709, %v700
        %v717 = vadd.s32 %v712, %v714
        %vm718 = vc.u32 %v712, %v714
        %v719 = vadd.s32 %v715, 1
        %v720 = vsel %vm718, %v719, %v715
        %v721 = vadd.s32 %v716, %v720
        %v722 = vadd.s32 %v721, 536870912
        %v723 = vshrl.u32 %v722, 30
        %v724 = vshll.u32 %v723, 30
        %v725 = vsub.s32 %v721, %v724
        %vm726 = vcmp.lt.s32.totalorder %v725, 0
        %v727 = vsub.s32 0, %v725
        %v728 = vsel %vm726, %v727, %v725
        %v729 = vclz %v728
        %v730 = vsub.s32 %v729, 2
        %vm731 = vcmp.gt.s32.totalorder 0, %v730
        %v732 = vsel %vm731, 0, %v730
        %v733 = vsub.s32 32, %v732
        %v734 = vshll.u32 %v725, %v732
        %v735 = vshrl.u32 %v717, %v733
        %v736 = vor.u32 %v734, %v735
        %v737 = vsub.s32 4294967266, %v732
        %v738 = vadd.s32 %v737, 127
        %v739 = vshll.u32 %v738, 23
        %v740 = vor.u32 4788187, %v739
        %v741 = vand.u32 2147483647, %v740
        %v743 = vcvt.s32.f32 %v736
        %v744 = vmul.f32 %v743, %v741
        %v745 = vxor.u32 %v744, 2147483648
        %v746 = vsel %vm663, %v745, %v744
        %v747 = vsub.s32 4, %v723
        %v748 = vsel %vm663, %v747, %v723
        %v749 = vsel %vm662, %v225, %v746
        %v750 = vsel %vm662, 0, %v748
        %v751 = vcosq.f32.pop %v749
        %v752 = vsinq.f32.pop %v749
        %vm753 = vweird.f32 %v225
        %v754 = vadd.s32 %v750, 3
        %v755 = vand.u32 %v754, 3
        %vm756 = vcmp.lt.s32.totalorder %v755, 2
        %vm757 = vcmp.eq.s32.totalorder %v755, 0
        %v758 = vxor.u32 %v752, 2147483648
        %v759 = vsel %vm757, %v751, %v758
        %vm760 = vcmp.eq.s32.totalorder %v755, 2
        %v761 = vxor.u32 %v751, 2147483648
        %v762 = vsel %vm760, %v761, %v752
        %v763 = vsel %vm756, %v759, %v762
        %v764 = vsel %vm753, nan, %v763
        %v765 = vand.u32 2147483647, %v226
        %vm766 = vcmp.le.f32.partialorder %v765, 0.7853982
        %vm767 = vcmp.lt.s32.totalorder %v226, 0
        %v768 = vand.u32 %v226, 2139095040
        %v769 = vshrl.u32 %v768, 23
        %v770 = vsub.s32 %v769, 127
        %v771 = vand.u32 2147483647, %v226
        %v772 = vand.u32 %v771, 8388607
        %v773 = vor.u32 %v772, 8388608
        %v774 = vsub.s32 0, %v773
        %v775 = vadd.s32 %v770, 1
        %vm776 = vcmp.gt.s32.totalorder %v775, 0
        %v777 = vsel %vm776, %v775, 0
        %v778 = vshrl.u32 %v777, 5
        %v779 = vand.u32 %v777, 31
        %v780 = vsub.s32 32, %v779
        %v781 = vshrl.u32 683565275, %v780
        %v782 = vshll.u32 683565275, %v779
        %v783 = vshrl.u32 2475754826, %v780
        %v784 = vor.u32 %v782, %v783
        %v785 = vshll.u32 2475754826, %v779
        %v786 = vshrl.u32 2131351028, %v780
        %v787 = vor.u32 %v785, %v786
        %v788 = vshll.u32 2131351028, %v779
        %v789 = vshrl.u32 2102212464, %v780
        %v790 = vor.u32 %v788, %v789
        %v791 = vshll.u32 2102212464, %v779
        %v792 = vshrl.u32 920167782, %v780
        %v793 = vor.u32 %v791, %v792
        %v794 = vshll.u32 920167782, %v779
        %v795 = vshrl.u32 1326507024, %v780
        %v796 = vor.u32 %v794, %v795
        %vm797 = vcmp.lt.s32.totalorder %v778, 1
        %vm798 = vcmp.lt.s32.totalorder %v778, 2
        %vm799 = vcmp.lt.s32.totalorder %v778, 3
        %vm800 = vcmp.lt.s32.totalorder %v778, 4
        %v801 = vsel %vm797, %v781, %v784
        %v802 = vsel %vm800, %v790, 2102212464
        %v803 = vsel %vm799, %v787, %v802
        %v804 = vsel %vm798, %v801, %v803
        %v805 = vsel %vm797, %v784, %v787
        %v806 = vsel %vm800, %v793, 920167782
        %v807 = vsel %vm799, %v790, %v806
        %v808 = vsel %vm798, %v805, %v807
        %v809 = vsel %vm797, %v787, %v790
        %v810 = vsel %vm800, %v796, 1326507024
        %v811 = vsel %vm799, %v793, %v810
        %v812 = vsel %vm798, %v809, %v811
        %v813 = vshll.u32 %v773, 8
        %v814 = vmul.u32.u64.compose %v813, %v812
        %v815 = vextract.low.u32 %v814
        %v816 = vextract.high.u32 %v814
        %v817 = vmul.u32.u64.compose %v813, %v808
        %v818 = vextract.low.u32 %v817
        %v819 = vextract.high.u32 %v817
        %v820 = vmul.u32 %v813, %v804
        %v821 = vadd.s32 %v816, %v818
        %vm822 = vc.u32 %v816, %v818
        %v823 = vadd.s32 %v819, 1
        %v824 = vsel %vm822, %v823, %v819
        %v825 = vadd.s32 %v820, %v824
        %v826 = vadd.s32 %v825, 536870912
        %v827 = vshrl.u32 %v826, 30
        %v828 = vshll.u32 %v827, 30
        %v829 = vsub.s32 %v825, %v828
        %vm830 = vcmp.lt.s32.totalorder %v829, 0
        %v831 = vsub.s32 0, %v829
        %v832 = vsel %vm830, %v831, %v829
        %v833 = vclz %v832
        %v834 = vsub.s32 %v833, 2
        %vm835 = vcmp.gt.s32.totalorder 0, %v834
        %v836 = vsel %vm835, 0, %v834
        %v837 = vsub.s32 32, %v836
        %v838 = vshll.u32 %v829, %v836
        %v839 = vshrl.u32 %v821, %v837
        %v840 = vor.u32 %v838, %v839
        %v841 = vsub.s32 4294967266, %v836
        %v842 = vadd.s32 %v841, 127
        %v843 = vshll.u32 %v842, 23
        %v844 = vor.u32 4788187, %v843
        %v845 = vand.u32 2147483647, %v844
        %v847 = vcvt.s32.f32 %v840
        %v848 = vmul.f32 %v847, %v845
        %v849 = vxor.u32 %v848, 2147483648
        %v850 = vsel %vm767, %v849, %v848
        %v851 = vsub.s32 4, %v827
        %v852 = vsel %vm767, %v851, %v827
        %v853 = vsel %vm766, %v226, %v850
        %v854 = vsel %vm766, 0, %v852
        %v855 = vcosq.f32.pop %v853
        %v856 = vsinq.f32.pop %v853
        %vm857 = vweird.f32 %v226
        %v858 = vadd.s32 %v854, 3
        %v859 = vand.u32 %v858, 3
        %vm860 = vcmp.lt.s32.totalorder %v859, 2
        %vm861 = vcmp.eq.s32.totalorder %v859, 0
        %v862 = vxor.u32 %v856, 2147483648
        %v863 = vsel %vm861, %v855, %v862
        %vm864 = vcmp.eq.s32.totalorder %v859, 2
        %v865 = vxor.u32 %v855, 2147483648
        %v866 = vsel %vm864, %v865, %v856
        %v867 = vsel %vm860, %v863, %v866
        %v868 = vsel %vm857, nan, %v867
        %v869 = vand.u32 2147483647, %v227
        %vm870 = vcmp.le.f32.partialorder %v869, 0.7853982
        %vm871 = vcmp.lt.s32.totalorder %v227, 0
        %v872 = vand.u32 %v227, 2139095040
        %v873 = vshrl.u32 %v872, 23
        %v874 = vsub.s32 %v873, 127
        %v875 = vand.u32 2147483647, %v227
        %v876 = vand.u32 %v875, 8388607
        %v877 = vor.u32 %v876, 8388608
        %v878 = vsub.s32 0, %v877
        %v879 = vadd.s32 %v874, 1
        %vm880 = vcmp.gt.s32.totalorder %v879, 0
        %v881 = vsel %vm880, %v879, 0
        %v882 = vshrl.u32 %v881, 5
        %v883 = vand.u32 %v881, 31
        %v884 = vsub.s32 32, %v883
        %v885 = vshrl.u32 683565275, %v884
        %v886 = vshll.u32 683565275, %v883
        %v887 = vshrl.u32 2475754826, %v884
        %v888 = vor.u32 %v886, %v887
        %v889 = vshll.u32 2475754826, %v883
        %v890 = vshrl.u32 2131351028, %v884
        %v891 = vor.u32 %v889, %v890
        %v892 = vshll.u32 2131351028, %v883
        %v893 = vshrl.u32 2102212464, %v884
        %v894 = vor.u32 %v892, %v893
        %v895 = vshll.u32 2102212464, %v883
        %v896 = vshrl.u32 920167782, %v884
        %v897 = vor.u32 %v895, %v896
        %v898 = vshll.u32 920167782, %v883
        %v899 = vshrl.u32 1326507024, %v884
        %v900 = vor.u32 %v898, %v899
        %vm901 = vcmp.lt.s32.totalorder %v882, 1
        %vm902 = vcmp.lt.s32.totalorder %v882, 2
        %vm903 = vcmp.lt.s32.totalorder %v882, 3
        %vm904 = vcmp.lt.s32.totalorder %v882, 4
        %v905 = vsel %vm901, %v885, %v888
        %v906 = vsel %vm904, %v894, 2102212464
        %v907 = vsel %vm903, %v891, %v906
        %v908 = vsel %vm902, %v905, %v907
        %v909 = vsel %vm901, %v888, %v891
        %v910 = vsel %vm904, %v897, 920167782
        %v911 = vsel %vm903, %v894, %v910
        %v912 = vsel %vm902, %v909, %v911
        %v913 = vsel %vm901, %v891, %v894
        %v914 = vsel %vm904, %v900, 1326507024
        %v915 = vsel %vm903, %v897, %v914
        %v916 = vsel %vm902, %v913, %v915
        %v917 = vshll.u32 %v877, 8
        %v918 = vmul.u32.u64.compose %v917, %v916
        %v919 = vextract.low.u32 %v918
        %v920 = vextract.high.u32 %v918
        %v921 = vmul.u32.u64.compose %v917, %v912
        %v922 = vextract.low.u32 %v921
        %v923 = vextract.high.u32 %v921
        %v924 = vmul.u32 %v917, %v908
        %v925 = vadd.s32 %v920, %v922
        %vm926 = vc.u32 %v920, %v922
        %v927 = vadd.s32 %v923, 1
        %v928 = vsel %vm926, %v927, %v923
        %v929 = vadd.s32 %v924, %v928
        %v930 = vadd.s32 %v929, 536870912
        %v931 = vshrl.u32 %v930, 30
        %v932 = vshll.u32 %v931, 30
        %v933 = vsub.s32 %v929, %v932
        %vm934 = vcmp.lt.s32.totalorder %v933, 0
        %v935 = vsub.s32 0, %v933
        %v936 = vsel %vm934, %v935, %v933
        %v937 = vclz %v936
        %v938 = vsub.s32 %v937, 2
        %vm939 = vcmp.gt.s32.totalorder 0, %v938
        %v940 = vsel %vm939, 0, %v938
        %v941 = vsub.s32 32, %v940
        %v942 = vshll.u32 %v933, %v940
        %v943 = vshrl.u32 %v925, %v941
        %v944 = vor.u32 %v942, %v943
        %v945 = vsub.s32 4294967266, %v940
        %v946 = vadd.s32 %v945, 127
        %v947 = vshll.u32 %v946, 23
        %v948 = vor.u32 4788187, %v947
        %v949 = vand.u32 2147483647, %v948
        %v951 = vcvt.s32.f32 %v944
        %v952 = vmul.f32 %v951, %v949
        %v953 = vxor.u32 %v952, 2147483648
        %v954 = vsel %vm871, %v953, %v952
        %v955 = vsub.s32 4, %v931
        %v956 = vsel %vm871, %v955, %v931
        %v957 = vsel %vm870, %v227, %v954
        %v958 = vsel %vm870, 0, %v956
        %v959 = vcosq.f32.pop %v957
        %v960 = vsinq.f32.pop %v957
        %vm961 = vweird.f32 %v227
        %v962 = vadd.s32 %v958, 3
        %v963 = vand.u32 %v962, 3
        %vm964 = vcmp.lt.s32.totalorder %v963, 2
        %vm965 = vcmp.eq.s32.totalorder %v963, 0
        %v966 = vxor.u32 %v960, 2147483648
        %v967 = vsel %vm965, %v959, %v966
        %vm968 = vcmp.eq.s32.totalorder %v963, 2
        %v969 = vxor.u32 %v959, 2147483648
        %v970 = vsel %vm968, %v969, %v960
        %v971 = vsel %vm964, %v967, %v970
        %v972 = vsel %vm961, nan, %v971
        %v973 = vand.u32 2147483647, %v228
        %vm974 = vcmp.le.f32.partialorder %v973, 0.7853982
        %vm975 = vcmp.lt.s32.totalorder %v228, 0
        %v976 = vand.u32 %v228, 2139095040
        %v977 = vshrl.u32 %v976, 23
        %v978 = vsub.s32 %v977, 127
        %v979 = vand.u32 2147483647, %v228
        %v980 = vand.u32 %v979, 8388607
        %v981 = vor.u32 %v980, 8388608
        %v982 = vsub.s32 0, %v981
        %v983 = vadd.s32 %v978, 1
        %vm984 = vcmp.gt.s32.totalorder %v983, 0
        %v985 = vsel %vm984, %v983, 0
        %v986 = vshrl.u32 %v985, 5
        %v987 = vand.u32 %v985, 31
        %v988 = vsub.s32 32, %v987
        %v989 = vshrl.u32 683565275, %v988
        %v990 = vshll.u32 683565275, %v987
        %v991 = vshrl.u32 2475754826, %v988
        %v992 = vor.u32 %v990, %v991
        %v993 = vshll.u32 2475754826, %v987
        %v994 = vshrl.u32 2131351028, %v988
        %v995 = vor.u32 %v993, %v994
        %v996 = vshll.u32 2131351028, %v987
        %v997 = vshrl.u32 2102212464, %v988
        %v998 = vor.u32 %v996, %v997
        %v999 = vshll.u32 2102212464, %v987
        %v1000 = vshrl.u32 920167782, %v988
        %v1001 = vor.u32 %v999, %v1000
        %v1002 = vshll.u32 920167782, %v987
        %v1003 = vshrl.u32 1326507024, %v988
        %v1004 = vor.u32 %v1002, %v1003
        %vm1005 = vcmp.lt.s32.totalorder %v986, 1
        %vm1006 = vcmp.lt.s32.totalorder %v986, 2
        %vm1007 = vcmp.lt.s32.totalorder %v986, 3
        %vm1008 = vcmp.lt.s32.totalorder %v986, 4
        %v1009 = vsel %vm1005, %v989, %v992
        %v1010 = vsel %vm1008, %v998, 2102212464
        %v1011 = vsel %vm1007, %v995, %v1010
        %v1012 = vsel %vm1006, %v1009, %v1011
        %v1013 = vsel %vm1005, %v992, %v995
        %v1014 = vsel %vm1008, %v1001, 920167782
        %v1015 = vsel %vm1007, %v998, %v1014
        %v1016 = vsel %vm1006, %v1013, %v1015
        %v1017 = vsel %vm1005, %v995, %v998
        %v1018 = vsel %vm1008, %v1004, 1326507024
        %v1019 = vsel %vm1007, %v1001, %v1018
        %v1020 = vsel %vm1006, %v1017, %v1019
        %v1021 = vshll.u32 %v981, 8
        %v1022 = vmul.u32.u64.compose %v1021, %v1020
        %v1023 = vextract.low.u32 %v1022
        %v1024 = vextract.high.u32 %v1022
        %v1025 = vmul.u32.u64.compose %v1021, %v1016
        %v1026 = vextract.low.u32 %v1025
        %v1027 = vextract.high.u32 %v1025
        %v1028 = vmul.u32 %v1021, %v1012
        %v1029 = vadd.s32 %v1024, %v1026
        %vm1030 = vc.u32 %v1024, %v1026
        %v1031 = vadd.s32 %v1027, 1
        %v1032 = vsel %vm1030, %v1031, %v1027
        %v1033 = vadd.s32 %v1028, %v1032
        %v1034 = vadd.s32 %v1033, 536870912
        %v1035 = vshrl.u32 %v1034, 30
        %v1036 = vshll.u32 %v1035, 30
        %v1037 = vsub.s32 %v1033, %v1036
        %vm1038 = vcmp.lt.s32.totalorder %v1037, 0
        %v1039 = vsub.s32 0, %v1037
        %v1040 = vsel %vm1038, %v1039, %v1037
        %v1041 = vclz %v1040
        %v1042 = vsub.s32 %v1041, 2
        %vm1043 = vcmp.gt.s32.totalorder 0, %v1042
        %v1044 = vsel %vm1043, 0, %v1042
        %v1045 = vsub.s32 32, %v1044
        %v1046 = vshll.u32 %v1037, %v1044
        %v1047 = vshrl.u32 %v1029, %v1045
        %v1048 = vor.u32 %v1046, %v1047
        %v1049 = vsub.s32 4294967266, %v1044
        %v1050 = vadd.s32 %v1049, 127
        %v1051 = vshll.u32 %v1050, 23
        %v1052 = vor.u32 4788187, %v1051
        %v1053 = vand.u32 2147483647, %v1052
        %v1055 = vcvt.s32.f32 %v1048
        %v1056 = vmul.f32 %v1055, %v1053
        %v1057 = vxor.u32 %v1056, 2147483648
        %v1058 = vsel %vm975, %v1057, %v1056
        %v1059 = vsub.s32 4, %v1035
        %v1060 = vsel %vm975, %v1059, %v1035
        %v1061 = vsel %vm974, %v228, %v1058
        %v1062 = vsel %vm974, 0, %v1060
        %v1063 = vcosq.f32.pop %v1061
        %v1064 = vsinq.f32.pop %v1061
        %vm1065 = vweird.f32 %v228
        %v1066 = vadd.s32 %v1062, 3
        %v1067 = vand.u32 %v1066, 3
        %vm1068 = vcmp.lt.s32.totalorder %v1067, 2
        %vm1069 = vcmp.eq.s32.totalorder %v1067, 0
        %v1070 = vxor.u32 %v1064, 2147483648
        %v1071 = vsel %vm1069, %v1063, %v1070
        %vm1072 = vcmp.eq.s32.totalorder %v1067, 2
        %v1073 = vxor.u32 %v1063, 2147483648
        %v1074 = vsel %vm1072, %v1073, %v1064
        %v1075 = vsel %vm1068, %v1071, %v1074
        %v1076 = vsel %vm1065, nan, %v1075
        %v1077 = vsub.f32 0.0, %v348
        %v1078 = vsub.f32 0.0, %v452
        %v1079 = vsub.f32 0.0, %v556
        %v1080 = vsub.f32 0.0, %v660
        %v1081 = vsub.f32 0.0, %v764
        %v1082 = vsub.f32 0.0, %v868
        %v1083 = vsub.f32 0.0, %v972
        %v1084 = vsub.f32 0.0, %v1076
        %v1085 = vmul.f32 %v229, 3.0
        %v1086 = vmul.f32 %v230, 3.0
        %v1087 = vmul.f32 %v231, 3.0
        %v1088 = vmul.f32 %v232, 3.0
        %v1089 = vmul.f32 %v233, 3.0
        %v1090 = vmul.f32 %v234, 3.0
        %v1091 = vmul.f32 %v235, 3.0
        %v1092 = vmul.f32 %v236, 3.0
        %v1093 = vand.u32 2147483647, %v1085
        %vm1094 = vcmp.le.f32.partialorder %v1093, 0.7853982
        %vm1095 = vcmp.lt.s32.totalorder %v1085, 0
        %v1096 = vand.u32 %v1085, 2139095040
        %v1097 = vshrl.u32 %v1096, 23
        %v1098 = vsub.s32 %v1097, 127
        %v1099 = vand.u32 2147483647, %v1085
        %v1100 = vand.u32 %v1099, 8388607
        %v1101 = vor.u32 %v1100, 8388608
        %v1102 = vsub.s32 0, %v1101
        %v1103 = vadd.s32 %v1098, 1
        %vm1104 = vcmp.gt.s32.totalorder %v1103, 0
        %v1105 = vsel %vm1104, %v1103, 0
        %v1106 = vshrl.u32 %v1105, 5
        %v1107 = vand.u32 %v1105, 31
        %v1108 = vsub.s32 32, %v1107
        %v1109 = vshrl.u32 683565275, %v1108
        %v1110 = vshll.u32 683565275, %v1107
        %v1111 = vshrl.u32 2475754826, %v1108
        %v1112 = vor.u32 %v1110, %v1111
        %v1113 = vshll.u32 2475754826, %v1107
        %v1114 = vshrl.u32 2131351028, %v1108
        %v1115 = vor.u32 %v1113, %v1114
        %v1116 = vshll.u32 2131351028, %v1107
        %v1117 = vshrl.u32 2102212464, %v1108
        %v1118 = vor.u32 %v1116, %v1117
        %v1119 = vshll.u32 2102212464, %v1107
        %v1120 = vshrl.u32 920167782, %v1108
        %v1121 = vor.u32 %v1119, %v1120
        %v1122 = vshll.u32 920167782, %v1107
        %v1123 = vshrl.u32 1326507024, %v1108
        %v1124 = vor.u32 %v1122, %v1123
        %vm1125 = vcmp.lt.s32.totalorder %v1106, 1
        %vm1126 = vcmp.lt.s32.totalorder %v1106, 2
        %vm1127 = vcmp.lt.s32.totalorder %v1106, 3
        %vm1128 = vcmp.lt.s32.totalorder %v1106, 4
        %v1129 = vsel %vm1125, %v1109, %v1112
        %v1130 = vsel %vm1128, %v1118, 2102212464
        %v1131 = vsel %vm1127, %v1115, %v1130
        %v1132 = vsel %vm1126, %v1129, %v1131
        %v1133 = vsel %vm1125, %v1112, %v1115
        %v1134 = vsel %vm1128, %v1121, 920167782
        %v1135 = vsel %vm1127, %v1118, %v1134
        %v1136 = vsel %vm1126, %v1133, %v1135
        %v1137 = vsel %vm1125, %v1115, %v1118
        %v1138 = vsel %vm1128, %v1124, 1326507024
        %v1139 = vsel %vm1127, %v1121, %v1138
        %v1140 = vsel %vm1126, %v1137, %v1139
        %v1141 = vshll.u32 %v1101, 8
        %v1142 = vmul.u32.u64.compose %v1141, %v1140
        %v1143 = vextract.low.u32 %v1142
        %v1144 = vextract.high.u32 %v1142
        %v1145 = vmul.u32.u64.compose %v1141, %v1136
        %v1146 = vextract.low.u32 %v1145
        %v1147 = vextract.high.u32 %v1145
        %v1148 = vmul.u32 %v1141, %v1132
        %v1149 = vadd.s32 %v1144, %v1146
        %vm1150 = vc.u32 %v1144, %v1146
        %v1151 = vadd.s32 %v1147, 1
        %v1152 = vsel %vm1150, %v1151, %v1147
        %v1153 = vadd.s32 %v1148, %v1152
        %v1154 = vadd.s32 %v1153, 536870912
        %v1155 = vshrl.u32 %v1154, 30
        %v1156 = vshll.u32 %v1155, 30
        %v1157 = vsub.s32 %v1153, %v1156
        %vm1158 = vcmp.lt.s32.totalorder %v1157, 0
        %v1159 = vsub.s32 0, %v1157
        %v1160 = vsel %vm1158, %v1159, %v1157
        %v1161 = vclz %v1160
        %v1162 = vsub.s32 %v1161, 2
        %vm1163 = vcmp.gt.s32.totalorder 0, %v1162
        %v1164 = vsel %vm1163, 0, %v1162
        %v1165 = vsub.s32 32, %v1164
        %v1166 = vshll.u32 %v1157, %v1164
        %v1167 = vshrl.u32 %v1149, %v1165
        %v1168 = vor.u32 %v1166, %v1167
        %v1169 = vsub.s32 4294967266, %v1164
        %v1170 = vadd.s32 %v1169, 127
        %v1171 = vshll.u32 %v1170, 23
        %v1172 = vor.u32 4788187, %v1171
        %v1173 = vand.u32 2147483647, %v1172
        %v1175 = vcvt.s32.f32 %v1168
        %v1176 = vmul.f32 %v1175, %v1173
        %v1177 = vxor.u32 %v1176, 2147483648
        %v1178 = vsel %vm1095, %v1177, %v1176
        %v1179 = vsub.s32 4, %v1155
        %v1180 = vsel %vm1095, %v1179, %v1155
        %v1181 = vsel %vm1094, %v1085, %v1178
        %v1182 = vsel %vm1094, 0, %v1180
        %v1183 = vcosq.f32.pop %v1181
        %v1184 = vsinq.f32.pop %v1181
        %vm1185 = vweird.f32 %v1085
        %v1186 = vand.u32 %v1182, 3
        %vm1187 = vcmp.lt.s32.totalorder %v1186, 2
        %vm1188 = vcmp.eq.s32.totalorder %v1186, 0
        %v1189 = vxor.u32 %v1184, 2147483648
        %v1190 = vsel %vm1188, %v1183, %v1189
        %vm1191 = vcmp.eq.s32.totalorder %v1186, 2
        %v1192 = vxor.u32 %v1183, 2147483648
        %v1193 = vsel %vm1191, %v1192, %v1184
        %v1194 = vsel %vm1187, %v1190, %v1193
        %v1195 = vsel %vm1185, nan, %v1194
        %v1196 = vand.u32 2147483647, %v1086
        %vm1197 = vcmp.le.f32.partialorder %v1196, 0.7853982
        %vm1198 = vcmp.lt.s32.totalorder %v1086, 0
        %v1199 = vand.u32 %v1086, 2139095040
        %v1200 = vshrl.u32 %v1199, 23
        %v1201 = vsub.s32 %v1200, 127
        %v1202 = vand.u32 2147483647, %v1086
        %v1203 = vand.u32 %v1202, 8388607
        %v1204 = vor.u32 %v1203, 8388608
        %v1205 = vsub.s32 0, %v1204
        %v1206 = vadd.s32 %v1201, 1
        %vm1207 = vcmp.gt.s32.totalorder %v1206, 0
        %v1208 = vsel %vm1207, %v1206, 0
        %v1209 = vshrl.u32 %v1208, 5
        %v1210 = vand.u32 %v1208, 31
        %v1211 = vsub.s32 32, %v1210
        %v1212 = vshrl.u32 683565275, %v1211
        %v1213 = vshll.u32 683565275, %v1210
        %v1214 = vshrl.u32 2475754826, %v1211
        %v1215 = vor.u32 %v1213, %v1214
        %v1216 = vshll.u32 2475754826, %v1210
        %v1217 = vshrl.u32 2131351028, %v1211
        %v1218 = vor.u32 %v1216, %v1217
        %v1219 = vshll.u32 2131351028, %v1210
        %v1220 = vshrl.u32 2102212464, %v1211
        %v1221 = vor.u32 %v1219, %v1220
        %v1222 = vshll.u32 2102212464, %v1210
        %v1223 = vshrl.u32 920167782, %v1211
        %v1224 = vor.u32 %v1222, %v1223
        %v1225 = vshll.u32 920167782, %v1210
        %v1226 = vshrl.u32 1326507024, %v1211
        %v1227 = vor.u32 %v1225, %v1226
        %vm1228 = vcmp.lt.s32.totalorder %v1209, 1
        %vm1229 = vcmp.lt.s32.totalorder %v1209, 2
        %vm1230 = vcmp.lt.s32.totalorder %v1209, 3
        %vm1231 = vcmp.lt.s32.totalorder %v1209, 4
        %v1232 = vsel %vm1228, %v1212, %v1215
        %v1233 = vsel %vm1231, %v1221, 2102212464
        %v1234 = vsel %vm1230, %v1218, %v1233
        %v1235 = vsel %vm1229, %v1232, %v1234
        %v1236 = vsel %vm1228, %v1215, %v1218
        %v1237 = vsel %vm1231, %v1224, 920167782
        %v1238 = vsel %vm1230, %v1221, %v1237
        %v1239 = vsel %vm1229, %v1236, %v1238
        %v1240 = vsel %vm1228, %v1218, %v1221
        %v1241 = vsel %vm1231, %v1227, 1326507024
        %v1242 = vsel %vm1230, %v1224, %v1241
        %v1243 = vsel %vm1229, %v1240, %v1242
        %v1244 = vshll.u32 %v1204, 8
        %v1245 = vmul.u32.u64.compose %v1244, %v1243
        %v1246 = vextract.low.u32 %v1245
        %v1247 = vextract.high.u32 %v1245
        %v1248 = vmul.u32.u64.compose %v1244, %v1239
        %v1249 = vextract.low.u32 %v1248
        %v1250 = vextract.high.u32 %v1248
        %v1251 = vmul.u32 %v1244, %v1235
        %v1252 = vadd.s32 %v1247, %v1249
        %vm1253 = vc.u32 %v1247, %v1249
        %v1254 = vadd.s32 %v1250, 1
        %v1255 = vsel %vm1253, %v1254, %v1250
        %v1256 = vadd.s32 %v1251, %v1255
        %v1257 = vadd.s32 %v1256, 536870912
        %v1258 = vshrl.u32 %v1257, 30
        %v1259 = vshll.u32 %v1258, 30
        %v1260 = vsub.s32 %v1256, %v1259
        %vm1261 = vcmp.lt.s32.totalorder %v1260, 0
        %v1262 = vsub.s32 0, %v1260
        %v1263 = vsel %vm1261, %v1262, %v1260
        %v1264 = vclz %v1263
        %v1265 = vsub.s32 %v1264, 2
        %vm1266 = vcmp.gt.s32.totalorder 0, %v1265
        %v1267 = vsel %vm1266, 0, %v1265
        %v1268 = vsub.s32 32, %v1267
        %v1269 = vshll.u32 %v1260, %v1267
        %v1270 = vshrl.u32 %v1252, %v1268
        %v1271 = vor.u32 %v1269, %v1270
        %v1272 = vsub.s32 4294967266, %v1267
        %v1273 = vadd.s32 %v1272, 127
        %v1274 = vshll.u32 %v1273, 23
        %v1275 = vor.u32 4788187, %v1274
        %v1276 = vand.u32 2147483647, %v1275
        %v1278 = vcvt.s32.f32 %v1271
        %v1279 = vmul.f32 %v1278, %v1276
        %v1280 = vxor.u32 %v1279, 2147483648
        %v1281 = vsel %vm1198, %v1280, %v1279
        %v1282 = vsub.s32 4, %v1258
        %v1283 = vsel %vm1198, %v1282, %v1258
        %v1284 = vsel %vm1197, %v1086, %v1281
        %v1285 = vsel %vm1197, 0, %v1283
        %v1286 = vcosq.f32.pop %v1284
        %v1287 = vsinq.f32.pop %v1284
        %vm1288 = vweird.f32 %v1086
        %v1289 = vand.u32 %v1285, 3
        %vm1290 = vcmp.lt.s32.totalorder %v1289, 2
        %vm1291 = vcmp.eq.s32.totalorder %v1289, 0
        %v1292 = vxor.u32 %v1287, 2147483648
        %v1293 = vsel %vm1291, %v1286, %v1292
        %vm1294 = vcmp.eq.s32.totalorder %v1289, 2
        %v1295 = vxor.u32 %v1286, 2147483648
        %v1296 = vsel %vm1294, %v1295, %v1287
        %v1297 = vsel %vm1290, %v1293, %v1296
        %v1298 = vsel %vm1288, nan, %v1297
        %v1299 = vand.u32 2147483647, %v1087
        %vm1300 = vcmp.le.f32.partialorder %v1299, 0.7853982
        %vm1301 = vcmp.lt.s32.totalorder %v1087, 0
        %v1302 = vand.u32 %v1087, 2139095040
        %v1303 = vshrl.u32 %v1302, 23
        %v1304 = vsub.s32 %v1303, 127
        %v1305 = vand.u32 2147483647, %v1087
        %v1306 = vand.u32 %v1305, 8388607
        %v1307 = vor.u32 %v1306, 8388608
        %v1308 = vsub.s32 0, %v1307
        %v1309 = vadd.s32 %v1304, 1
        %vm1310 = vcmp.gt.s32.totalorder %v1309, 0
        %v1311 = vsel %vm1310, %v1309, 0
        %v1312 = vshrl.u32 %v1311, 5
        %v1313 = vand.u32 %v1311, 31
        %v1314 = vsub.s32 32, %v1313
        %v1315 = vshrl.u32 683565275, %v1314
        %v1316 = vshll.u32 683565275, %v1313
        %v1317 = vshrl.u32 2475754826, %v1314
        %v1318 = vor.u32 %v1316, %v1317
        %v1319 = vshll.u32 2475754826, %v1313
        %v1320 = vshrl.u32 2131351028, %v1314
        %v1321 = vor.u32 %v1319, %v1320
        %v1322 = vshll.u32 2131351028, %v1313
        %v1323 = vshrl.u32 2102212464, %v1314
        %v1324 = vor.u32 %v1322, %v1323
        %v1325 = vshll.u32 2102212464, %v1313
        %v1326 = vshrl.u32 920167782, %v1314
        %v1327 = vor.u32 %v1325, %v1326
        %v1328 = vshll.u32 920167782, %v1313
        %v1329 = vshrl.u32 1326507024, %v1314
        %v1330 = vor.u32 %v1328, %v1329
        %vm1331 = vcmp.lt.s32.totalorder %v1312, 1
        %vm1332 = vcmp.lt.s32.totalorder %v1312, 2
        %vm1333 = vcmp.lt.s32.totalorder %v1312, 3
        %vm1334 = vcmp.lt.s32.totalorder %v1312, 4
        %v1335 = vsel %vm1331, %v1315, %v1318
        %v1336 = vsel %vm1334, %v1324, 2102212464
        %v1337 = vsel %vm1333, %v1321, %v1336
        %v1338 = vsel %vm1332, %v1335, %v1337
        %v1339 = vsel %vm1331, %v1318, %v1321
        %v1340 = vsel %vm1334, %v1327, 920167782
        %v1341 = vsel %vm1333, %v1324, %v1340
        %v1342 = vsel %vm1332, %v1339, %v1341
        %v1343 = vsel %vm1331, %v1321, %v1324
        %v1344 = vsel %vm1334, %v1330, 1326507024
        %v1345 = vsel %vm1333, %v1327, %v1344
        %v1346 = vsel %vm1332, %v1343, %v1345
        %v1347 = vshll.u32 %v1307, 8
        %v1348 = vmul.u32.u64.compose %v1347, %v1346
        %v1349 = vextract.low.u32 %v1348
        %v1350 = vextract.high.u32 %v1348
        %v1351 = vmul.u32.u64.compose %v1347, %v1342
        %v1352 = vextract.low.u32 %v1351
        %v1353 = vextract.high.u32 %v1351
        %v1354 = vmul.u32 %v1347, %v1338
        %v1355 = vadd.s32 %v1350, %v1352
        %vm1356 = vc.u32 %v1350, %v1352
        %v1357 = vadd.s32 %v1353, 1
        %v1358 = vsel %vm1356, %v1357, %v1353
        %v1359 = vadd.s32 %v1354, %v1358
        %v1360 = vadd.s32 %v1359, 536870912
        %v1361 = vshrl.u32 %v1360, 30
        %v1362 = vshll.u32 %v1361, 30
        %v1363 = vsub.s32 %v1359, %v1362
        %vm1364 = vcmp.lt.s32.totalorder %v1363, 0
        %v1365 = vsub.s32 0, %v1363
        %v1366 = vsel %vm1364, %v1365, %v1363
        %v1367 = vclz %v1366
        %v1368 = vsub.s32 %v1367, 2
        %vm1369 = vcmp.gt.s32.totalorder 0, %v1368
        %v1370 = vsel %vm1369, 0, %v1368
        %v1371 = vsub.s32 32, %v1370
        %v1372 = vshll.u32 %v1363, %v1370
        %v1373 = vshrl.u32 %v1355, %v1371
        %v1374 = vor.u32 %v1372, %v1373
        %v1375 = vsub.s32 4294967266, %v1370
        %v1376 = vadd.s32 %v1375, 127
        %v1377 = vshll.u32 %v1376, 23
        %v1378 = vor.u32 4788187, %v1377
        %v1379 = vand.u32 2147483647, %v1378
        %v1381 = vcvt.s32.f32 %v1374
        %v1382 = vmul.f32 %v1381, %v1379
        %v1383 = vxor.u32 %v1382, 2147483648
        %v1384 = vsel %vm1301, %v1383, %v1382
        %v1385 = vsub.s32 4, %v1361
        %v1386 = vsel %vm1301, %v1385, %v1361
        %v1387 = vsel %vm1300, %v1087, %v1384
        %v1388 = vsel %vm1300, 0, %v1386
        %v1389 = vcosq.f32.pop %v1387
        %v1390 = vsinq.f32.pop %v1387
        %vm1391 = vweird.f32 %v1087
        %v1392 = vand.u32 %v1388, 3
        %vm1393 = vcmp.lt.s32.totalorder %v1392, 2
        %vm1394 = vcmp.eq.s32.totalorder %v1392, 0
        %v1395 = vxor.u32 %v1390, 2147483648
        %v1396 = vsel %vm1394, %v1389, %v1395
        %vm1397 = vcmp.eq.s32.totalorder %v1392, 2
        %v1398 = vxor.u32 %v1389, 2147483648
        %v1399 = vsel %vm1397, %v1398, %v1390
        %v1400 = vsel %vm1393, %v1396, %v1399
        %v1401 = vsel %vm1391, nan, %v1400
        %v1402 = vand.u32 2147483647, %v1088
        %vm1403 = vcmp.le.f32.partialorder %v1402, 0.7853982
        %vm1404 = vcmp.lt.s32.totalorder %v1088, 0
        %v1405 = vand.u32 %v1088, 2139095040
        %v1406 = vshrl.u32 %v1405, 23
        %v1407 = vsub.s32 %v1406, 127
        %v1408 = vand.u32 2147483647, %v1088
        %v1409 = vand.u32 %v1408, 8388607
        %v1410 = vor.u32 %v1409, 8388608
        %v1411 = vsub.s32 0, %v1410
        %v1412 = vadd.s32 %v1407, 1
        %vm1413 = vcmp.gt.s32.totalorder %v1412, 0
        %v1414 = vsel %vm1413, %v1412, 0
        %v1415 = vshrl.u32 %v1414, 5
        %v1416 = vand.u32 %v1414, 31
        %v1417 = vsub.s32 32, %v1416
        %v1418 = vshrl.u32 683565275, %v1417
        %v1419 = vshll.u32 683565275, %v1416
        %v1420 = vshrl.u32 2475754826, %v1417
        %v1421 = vor.u32 %v1419, %v1420
        %v1422 = vshll.u32 2475754826, %v1416
        %v1423 = vshrl.u32 2131351028, %v1417
        %v1424 = vor.u32 %v1422, %v1423
        %v1425 = vshll.u32 2131351028, %v1416
        %v1426 = vshrl.u32 2102212464, %v1417
        %v1427 = vor.u32 %v1425, %v1426
        %v1428 = vshll.u32 2102212464, %v1416
        %v1429 = vshrl.u32 920167782, %v1417
        %v1430 = vor.u32 %v1428, %v1429
        %v1431 = vshll.u32 920167782, %v1416
        %v1432 = vshrl.u32 1326507024, %v1417
        %v1433 = vor.u32 %v1431, %v1432
        %vm1434 = vcmp.lt.s32.totalorder %v1415, 1
        %vm1435 = vcmp.lt.s32.totalorder %v1415, 2
        %vm1436 = vcmp.lt.s32.totalorder %v1415, 3
        %vm1437 = vcmp.lt.s32.totalorder %v1415, 4
        %v1438 = vsel %vm1434, %v1418, %v1421
        %v1439 = vsel %vm1437, %v1427, 2102212464
        %v1440 = vsel %vm1436, %v1424, %v1439
        %v1441 = vsel %vm1435, %v1438, %v1440
        %v1442 = vsel %vm1434, %v1421, %v1424
        %v1443 = vsel %vm1437, %v1430, 920167782
        %v1444 = vsel %vm1436, %v1427, %v1443
        %v1445 = vsel %vm1435, %v1442, %v1444
        %v1446 = vsel %vm1434, %v1424, %v1427
        %v1447 = vsel %vm1437, %v1433, 1326507024
        %v1448 = vsel %vm1436, %v1430, %v1447
        %v1449 = vsel %vm1435, %v1446, %v1448
        %v1450 = vshll.u32 %v1410, 8
        %v1451 = vmul.u32.u64.compose %v1450, %v1449
        %v1452 = vextract.low.u32 %v1451
        %v1453 = vextract.high.u32 %v1451
        %v1454 = vmul.u32.u64.compose %v1450, %v1445
        %v1455 = vextract.low.u32 %v1454
        %v1456 = vextract.high.u32 %v1454
        %v1457 = vmul.u32 %v1450, %v1441
        %v1458 = vadd.s32 %v1453, %v1455
        %vm1459 = vc.u32 %v1453, %v1455
        %v1460 = vadd.s32 %v1456, 1
        %v1461 = vsel %vm1459, %v1460, %v1456
        %v1462 = vadd.s32 %v1457, %v1461
        %v1463 = vadd.s32 %v1462, 536870912
        %v1464 = vshrl.u32 %v1463, 30
        %v1465 = vshll.u32 %v1464, 30
        %v1466 = vsub.s32 %v1462, %v1465
        %vm1467 = vcmp.lt.s32.totalorder %v1466, 0
        %v1468 = vsub.s32 0, %v1466
        %v1469 = vsel %vm1467, %v1468, %v1466
        %v1470 = vclz %v1469
        %v1471 = vsub.s32 %v1470, 2
        %vm1472 = vcmp.gt.s32.totalorder 0, %v1471
        %v1473 = vsel %vm1472, 0, %v1471
        %v1474 = vsub.s32 32, %v1473
        %v1475 = vshll.u32 %v1466, %v1473
        %v1476 = vshrl.u32 %v1458, %v1474
        %v1477 = vor.u32 %v1475, %v1476
        %v1478 = vsub.s32 4294967266, %v1473
        %v1479 = vadd.s32 %v1478, 127
        %v1480 = vshll.u32 %v1479, 23
        %v1481 = vor.u32 4788187, %v1480
        %v1482 = vand.u32 2147483647, %v1481
        %v1484 = vcvt.s32.f32 %v1477
        %v1485 = vmul.f32 %v1484, %v1482
        %v1486 = vxor.u32 %v1485, 2147483648
        %v1487 = vsel %vm1404, %v1486, %v1485
        %v1488 = vsub.s32 4, %v1464
        %v1489 = vsel %vm1404, %v1488, %v1464
        %v1490 = vsel %vm1403, %v1088, %v1487
        %v1491 = vsel %vm1403, 0, %v1489
        %v1492 = vcosq.f32.pop %v1490
        %v1493 = vsinq.f32.pop %v1490
        %vm1494 = vweird.f32 %v1088
        %v1495 = vand.u32 %v1491, 3
        %vm1496 = vcmp.lt.s32.totalorder %v1495, 2
        %vm1497 = vcmp.eq.s32.totalorder %v1495, 0
        %v1498 = vxor.u32 %v1493, 2147483648
        %v1499 = vsel %vm1497, %v1492, %v1498
        %vm1500 = vcmp.eq.s32.totalorder %v1495, 2
        %v1501 = vxor.u32 %v1492, 2147483648
        %v1502 = vsel %vm1500, %v1501, %v1493
        %v1503 = vsel %vm1496, %v1499, %v1502
        %v1504 = vsel %vm1494, nan, %v1503
        %v1505 = vand.u32 2147483647, %v1089
        %vm1506 = vcmp.le.f32.partialorder %v1505, 0.7853982
        %vm1507 = vcmp.lt.s32.totalorder %v1089, 0
        %v1508 = vand.u32 %v1089, 2139095040
        %v1509 = vshrl.u32 %v1508, 23
        %v1510 = vsub.s32 %v1509, 127
        %v1511 = vand.u32 2147483647, %v1089
        %v1512 = vand.u32 %v1511, 8388607
        %v1513 = vor.u32 %v1512, 8388608
        %v1514 = vsub.s32 0, %v1513
        %v1515 = vadd.s32 %v1510, 1
        %vm1516 = vcmp.gt.s32.totalorder %v1515, 0
        %v1517 = vsel %vm1516, %v1515, 0
        %v1518 = vshrl.u32 %v1517, 5
        %v1519 = vand.u32 %v1517, 31
        %v1520 = vsub.s32 32, %v1519
        %v1521 = vshrl.u32 683565275, %v1520
        %v1522 = vshll.u32 683565275, %v1519
        %v1523 = vshrl.u32 2475754826, %v1520
        %v1524 = vor.u32 %v1522, %v1523
        %v1525 = vshll.u32 2475754826, %v1519
        %v1526 = vshrl.u32 2131351028, %v1520
        %v1527 = vor.u32 %v1525, %v1526
        %v1528 = vshll.u32 2131351028, %v1519
        %v1529 = vshrl.u32 2102212464, %v1520
        %v1530 = vor.u32 %v1528, %v1529
        %v1531 = vshll.u32 2102212464, %v1519
        %v1532 = vshrl.u32 920167782, %v1520
        %v1533 = vor.u32 %v1531, %v1532
        %v1534 = vshll.u32 920167782, %v1519
        %v1535 = vshrl.u32 1326507024, %v1520
        %v1536 = vor.u32 %v1534, %v1535
        %vm1537 = vcmp.lt.s32.totalorder %v1518, 1
        %vm1538 = vcmp.lt.s32.totalorder %v1518, 2
        %vm1539 = vcmp.lt.s32.totalorder %v1518, 3
        %vm1540 = vcmp.lt.s32.totalorder %v1518, 4
        %v1541 = vsel %vm1537, %v1521, %v1524
        %v1542 = vsel %vm1540, %v1530, 2102212464
        %v1543 = vsel %vm1539, %v1527, %v1542
        %v1544 = vsel %vm1538, %v1541, %v1543
        %v1545 = vsel %vm1537, %v1524, %v1527
        %v1546 = vsel %vm1540, %v1533, 920167782
        %v1547 = vsel %vm1539, %v1530, %v1546
        %v1548 = vsel %vm1538, %v1545, %v1547
        %v1549 = vsel %vm1537, %v1527, %v1530
        %v1550 = vsel %vm1540, %v1536, 1326507024
        %v1551 = vsel %vm1539, %v1533, %v1550
        %v1552 = vsel %vm1538, %v1549, %v1551
        %v1553 = vshll.u32 %v1513, 8
        %v1554 = vmul.u32.u64.compose %v1553, %v1552
        %v1555 = vextract.low.u32 %v1554
        %v1556 = vextract.high.u32 %v1554
        %v1557 = vmul.u32.u64.compose %v1553, %v1548
        %v1558 = vextract.low.u32 %v1557
        %v1559 = vextract.high.u32 %v1557
        %v1560 = vmul.u32 %v1553, %v1544
        %v1561 = vadd.s32 %v1556, %v1558
        %vm1562 = vc.u32 %v1556, %v1558
        %v1563 = vadd.s32 %v1559, 1
        %v1564 = vsel %vm1562, %v1563, %v1559
        %v1565 = vadd.s32 %v1560, %v1564
        %v1566 = vadd.s32 %v1565, 536870912
        %v1567 = vshrl.u32 %v1566, 30
        %v1568 = vshll.u32 %v1567, 30
        %v1569 = vsub.s32 %v1565, %v1568
        %vm1570 = vcmp.lt.s32.totalorder %v1569, 0
        %v1571 = vsub.s32 0, %v1569
        %v1572 = vsel %vm1570, %v1571, %v1569
        %v1573 = vclz %v1572
        %v1574 = vsub.s32 %v1573, 2
        %vm1575 = vcmp.gt.s32.totalorder 0, %v1574
        %v1576 = vsel %vm1575, 0, %v1574
        %v1577 = vsub.s32 32, %v1576
        %v1578 = vshll.u32 %v1569, %v1576
        %v1579 = vshrl.u32 %v1561, %v1577
        %v1580 = vor.u32 %v1578, %v1579
        %v1581 = vsub.s32 4294967266, %v1576
        %v1582 = vadd.s32 %v1581, 127
        %v1583 = vshll.u32 %v1582, 23
        %v1584 = vor.u32 4788187, %v1583
        %v1585 = vand.u32 2147483647, %v1584
        %v1587 = vcvt.s32.f32 %v1580
        %v1588 = vmul.f32 %v1587, %v1585
        %v1589 = vxor.u32 %v1588, 2147483648
        %v1590 = vsel %vm1507, %v1589, %v1588
        %v1591 = vsub.s32 4, %v1567
        %v1592 = vsel %vm1507, %v1591, %v1567
        %v1593 = vsel %vm1506, %v1089, %v1590
        %v1594 = vsel %vm1506, 0, %v1592
        %v1595 = vcosq.f32.pop %v1593
        %v1596 = vsinq.f32.pop %v1593
        %vm1597 = vweird.f32 %v1089
        %v1598 = vand.u32 %v1594, 3
        %vm1599 = vcmp.lt.s32.totalorder %v1598, 2
        %vm1600 = vcmp.eq.s32.totalorder %v1598, 0
        %v1601 = vxor.u32 %v1596, 2147483648
        %v1602 = vsel %vm1600, %v1595, %v1601
        %vm1603 = vcmp.eq.s32.totalorder %v1598, 2
        %v1604 = vxor.u32 %v1595, 2147483648
        %v1605 = vsel %vm1603, %v1604, %v1596
        %v1606 = vsel %vm1599, %v1602, %v1605
        %v1607 = vsel %vm1597, nan, %v1606
        %v1608 = vand.u32 2147483647, %v1090
        %vm1609 = vcmp.le.f32.partialorder %v1608, 0.7853982
        %vm1610 = vcmp.lt.s32.totalorder %v1090, 0
        %v1611 = vand.u32 %v1090, 2139095040
        %v1612 = vshrl.u32 %v1611, 23
        %v1613 = vsub.s32 %v1612, 127
        %v1614 = vand.u32 2147483647, %v1090
        %v1615 = vand.u32 %v1614, 8388607
        %v1616 = vor.u32 %v1615, 8388608
        %v1617 = vsub.s32 0, %v1616
        %v1618 = vadd.s32 %v1613, 1
        %vm1619 = vcmp.gt.s32.totalorder %v1618, 0
        %v1620 = vsel %vm1619, %v1618, 0
        %v1621 = vshrl.u32 %v1620, 5
        %v1622 = vand.u32 %v1620, 31
        %v1623 = vsub.s32 32, %v1622
        %v1624 = vshrl.u32 683565275, %v1623
        %v1625 = vshll.u32 683565275, %v1622
        %v1626 = vshrl.u32 2475754826, %v1623
        %v1627 = vor.u32 %v1625, %v1626
        %v1628 = vshll.u32 2475754826, %v1622
        %v1629 = vshrl.u32 2131351028, %v1623
        %v1630 = vor.u32 %v1628, %v1629
        %v1631 = vshll.u32 2131351028, %v1622
        %v1632 = vshrl.u32 2102212464, %v1623
        %v1633 = vor.u32 %v1631, %v1632
        %v1634 = vshll.u32 2102212464, %v1622
        %v1635 = vshrl.u32 920167782, %v1623
        %v1636 = vor.u32 %v1634, %v1635
        %v1637 = vshll.u32 920167782, %v1622
        %v1638 = vshrl.u32 1326507024, %v1623
        %v1639 = vor.u32 %v1637, %v1638
        %vm1640 = vcmp.lt.s32.totalorder %v1621, 1
        %vm1641 = vcmp.lt.s32.totalorder %v1621, 2
        %vm1642 = vcmp.lt.s32.totalorder %v1621, 3
        %vm1643 = vcmp.lt.s32.totalorder %v1621, 4
        %v1644 = vsel %vm1640, %v1624, %v1627
        %v1645 = vsel %vm1643, %v1633, 2102212464
        %v1646 = vsel %vm1642, %v1630, %v1645
        %v1647 = vsel %vm1641, %v1644, %v1646
        %v1648 = vsel %vm1640, %v1627, %v1630
        %v1649 = vsel %vm1643, %v1636, 920167782
        %v1650 = vsel %vm1642, %v1633, %v1649
        %v1651 = vsel %vm1641, %v1648, %v1650
        %v1652 = vsel %vm1640, %v1630, %v1633
        %v1653 = vsel %vm1643, %v1639, 1326507024
        %v1654 = vsel %vm1642, %v1636, %v1653
        %v1655 = vsel %vm1641, %v1652, %v1654
        %v1656 = vshll.u32 %v1616, 8
        %v1657 = vmul.u32.u64.compose %v1656, %v1655
        %v1658 = vextract.low.u32 %v1657
        %v1659 = vextract.high.u32 %v1657
        %v1660 = vmul.u32.u64.compose %v1656, %v1651
        %v1661 = vextract.low.u32 %v1660
        %v1662 = vextract.high.u32 %v1660
        %v1663 = vmul.u32 %v1656, %v1647
        %v1664 = vadd.s32 %v1659, %v1661
        %vm1665 = vc.u32 %v1659, %v1661
        %v1666 = vadd.s32 %v1662, 1
        %v1667 = vsel %vm1665, %v1666, %v1662
        %v1668 = vadd.s32 %v1663, %v1667
        %v1669 = vadd.s32 %v1668, 536870912
        %v1670 = vshrl.u32 %v1669, 30
        %v1671 = vshll.u32 %v1670, 30
        %v1672 = vsub.s32 %v1668, %v1671
        %vm1673 = vcmp.lt.s32.totalorder %v1672, 0
        %v1674 = vsub.s32 0, %v1672
        %v1675 = vsel %vm1673, %v1674, %v1672
        %v1676 = vclz %v1675
        %v1677 = vsub.s32 %v1676, 2
        %vm1678 = vcmp.gt.s32.totalorder 0, %v1677
        %v1679 = vsel %vm1678, 0, %v1677
        %v1680 = vsub.s32 32, %v1679
        %v1681 = vshll.u32 %v1672, %v1679
        %v1682 = vshrl.u32 %v1664, %v1680
        %v1683 = vor.u32 %v1681, %v1682
        %v1684 = vsub.s32 4294967266, %v1679
        %v1685 = vadd.s32 %v1684, 127
        %v1686 = vshll.u32 %v1685, 23
        %v1687 = vor.u32 4788187, %v1686
        %v1688 = vand.u32 2147483647, %v1687
        %v1690 = vcvt.s32.f32 %v1683
        %v1691 = vmul.f32 %v1690, %v1688
        %v1692 = vxor.u32 %v1691, 2147483648
        %v1693 = vsel %vm1610, %v1692, %v1691
        %v1694 = vsub.s32 4, %v1670
        %v1695 = vsel %vm1610, %v1694, %v1670
        %v1696 = vsel %vm1609, %v1090, %v1693
        %v1697 = vsel %vm1609, 0, %v1695
        %v1698 = vcosq.f32.pop %v1696
        %v1699 = vsinq.f32.pop %v1696
        %vm1700 = vweird.f32 %v1090
        %v1701 = vand.u32 %v1697, 3
        %vm1702 = vcmp.lt.s32.totalorder %v1701, 2
        %vm1703 = vcmp.eq.s32.totalorder %v1701, 0
        %v1704 = vxor.u32 %v1699, 2147483648
        %v1705 = vsel %vm1703, %v1698, %v1704
        %vm1706 = vcmp.eq.s32.totalorder %v1701, 2
        %v1707 = vxor.u32 %v1698, 2147483648
        %v1708 = vsel %vm1706, %v1707, %v1699
        %v1709 = vsel %vm1702, %v1705, %v1708
        %v1710 = vsel %vm1700, nan, %v1709
        %v1711 = vand.u32 2147483647, %v1091
        %vm1712 = vcmp.le.f32.partialorder %v1711, 0.7853982
        %vm1713 = vcmp.lt.s32.totalorder %v1091, 0
        %v1714 = vand.u32 %v1091, 2139095040
        %v1715 = vshrl.u32 %v1714, 23
        %v1716 = vsub.s32 %v1715, 127
        %v1717 = vand.u32 2147483647, %v1091
        %v1718 = vand.u32 %v1717, 8388607
        %v1719 = vor.u32 %v1718, 8388608
        %v1720 = vsub.s32 0, %v1719
        %v1721 = vadd.s32 %v1716, 1
        %vm1722 = vcmp.gt.s32.totalorder %v1721, 0
        %v1723 = vsel %vm1722, %v1721, 0
        %v1724 = vshrl.u32 %v1723, 5
        %v1725 = vand.u32 %v1723, 31
        %v1726 = vsub.s32 32, %v1725
        %v1727 = vshrl.u32 683565275, %v1726
        %v1728 = vshll.u32 683565275, %v1725
        %v1729 = vshrl.u32 2475754826, %v1726
        %v1730 = vor.u32 %v1728, %v1729
        %v1731 = vshll.u32 2475754826, %v1725
        %v1732 = vshrl.u32 2131351028, %v1726
        %v1733 = vor.u32 %v1731, %v1732
        %v1734 = vshll.u32 2131351028, %v1725
        %v1735 = vshrl.u32 2102212464, %v1726
        %v1736 = vor.u32 %v1734, %v1735
        %v1737 = vshll.u32 2102212464, %v1725
        %v1738 = vshrl.u32 920167782, %v1726
        %v1739 = vor.u32 %v1737, %v1738
        %v1740 = vshll.u32 920167782, %v1725
        %v1741 = vshrl.u32 1326507024, %v1726
        %v1742 = vor.u32 %v1740, %v1741
        %vm1743 = vcmp.lt.s32.totalorder %v1724, 1
        %vm1744 = vcmp.lt.s32.totalorder %v1724, 2
        %vm1745 = vcmp.lt.s32.totalorder %v1724, 3
        %vm1746 = vcmp.lt.s32.totalorder %v1724, 4
        %v1747 = vsel %vm1743, %v1727, %v1730
        %v1748 = vsel %vm1746, %v1736, 2102212464
        %v1749 = vsel %vm1745, %v1733, %v1748
        %v1750 = vsel %vm1744, %v1747, %v1749
        %v1751 = vsel %vm1743, %v1730, %v1733
        %v1752 = vsel %vm1746, %v1739, 920167782
        %v1753 = vsel %vm1745, %v1736, %v1752
        %v1754 = vsel %vm1744, %v1751, %v1753
        %v1755 = vsel %vm1743, %v1733, %v1736
        %v1756 = vsel %vm1746, %v1742, 1326507024
        %v1757 = vsel %vm1745, %v1739, %v1756
        %v1758 = vsel %vm1744, %v1755, %v1757
        %v1759 = vshll.u32 %v1719, 8
        %v1760 = vmul.u32.u64.compose %v1759, %v1758
        %v1761 = vextract.low.u32 %v1760
        %v1762 = vextract.high.u32 %v1760
        %v1763 = vmul.u32.u64.compose %v1759, %v1754
        %v1764 = vextract.low.u32 %v1763
        %v1765 = vextract.high.u32 %v1763
        %v1766 = vmul.u32 %v1759, %v1750
        %v1767 = vadd.s32 %v1762, %v1764
        %vm1768 = vc.u32 %v1762, %v1764
        %v1769 = vadd.s32 %v1765, 1
        %v1770 = vsel %vm1768, %v1769, %v1765
        %v1771 = vadd.s32 %v1766, %v1770
        %v1772 = vadd.s32 %v1771, 536870912
        %v1773 = vshrl.u32 %v1772, 30
        %v1774 = vshll.u32 %v1773, 30
        %v1775 = vsub.s32 %v1771, %v1774
        %vm1776 = vcmp.lt.s32.totalorder %v1775, 0
        %v1777 = vsub.s32 0, %v1775
        %v1778 = vsel %vm1776, %v1777, %v1775
        %v1779 = vclz %v1778
        %v1780 = vsub.s32 %v1779, 2
        %vm1781 = vcmp.gt.s32.totalorder 0, %v1780
        %v1782 = vsel %vm1781, 0, %v1780
        %v1783 = vsub.s32 32, %v1782
        %v1784 = vshll.u32 %v1775, %v1782
        %v1785 = vshrl.u32 %v1767, %v1783
        %v1786 = vor.u32 %v1784, %v1785
        %v1787 = vsub.s32 4294967266, %v1782
        %v1788 = vadd.s32 %v1787, 127
        %v1789 = vshll.u32 %v1788, 23
        %v1790 = vor.u32 4788187, %v1789
        %v1791 = vand.u32 2147483647, %v1790
        %v1793 = vcvt.s32.f32 %v1786
        %v1794 = vmul.f32 %v1793, %v1791
        %v1795 = vxor.u32 %v1794, 2147483648
        %v1796 = vsel %vm1713, %v1795, %v1794
        %v1797 = vsub.s32 4, %v1773
        %v1798 = vsel %vm1713, %v1797, %v1773
        %v1799 = vsel %vm1712, %v1091, %v1796
        %v1800 = vsel %vm1712, 0, %v1798
        %v1801 = vcosq.f32.pop %v1799
        %v1802 = vsinq.f32.pop %v1799
        %vm1803 = vweird.f32 %v1091
        %v1804 = vand.u32 %v1800, 3
        %vm1805 = vcmp.lt.s32.totalorder %v1804, 2
        %vm1806 = vcmp.eq.s32.totalorder %v1804, 0
        %v1807 = vxor.u32 %v1802, 2147483648
        %v1808 = vsel %vm1806, %v1801, %v1807
        %vm1809 = vcmp.eq.s32.totalorder %v1804, 2
        %v1810 = vxor.u32 %v1801, 2147483648
        %v1811 = vsel %vm1809, %v1810, %v1802
        %v1812 = vsel %vm1805, %v1808, %v1811
        %v1813 = vsel %vm1803, nan, %v1812
        %v1814 = vand.u32 2147483647, %v1092
        %vm1815 = vcmp.le.f32.partialorder %v1814, 0.7853982
        %vm1816 = vcmp.lt.s32.totalorder %v1092, 0
        %v1817 = vand.u32 %v1092, 2139095040
        %v1818 = vshrl.u32 %v1817, 23
        %v1819 = vsub.s32 %v1818, 127
        %v1820 = vand.u32 2147483647, %v1092
        %v1821 = vand.u32 %v1820, 8388607
        %v1822 = vor.u32 %v1821, 8388608
        %v1823 = vsub.s32 0, %v1822
        %v1824 = vadd.s32 %v1819, 1
        %vm1825 = vcmp.gt.s32.totalorder %v1824, 0
        %v1826 = vsel %vm1825, %v1824, 0
        %v1827 = vshrl.u32 %v1826, 5
        %v1828 = vand.u32 %v1826, 31
        %v1829 = vsub.s32 32, %v1828
        %v1830 = vshrl.u32 683565275, %v1829
        %v1831 = vshll.u32 683565275, %v1828
        %v1832 = vshrl.u32 2475754826, %v1829
        %v1833 = vor.u32 %v1831, %v1832
        %v1834 = vshll.u32 2475754826, %v1828
        %v1835 = vshrl.u32 2131351028, %v1829
        %v1836 = vor.u32 %v1834, %v1835
        %v1837 = vshll.u32 2131351028, %v1828
        %v1838 = vshrl.u32 2102212464, %v1829
        %v1839 = vor.u32 %v1837, %v1838
        %v1840 = vshll.u32 2102212464, %v1828
        %v1841 = vshrl.u32 920167782, %v1829
        %v1842 = vor.u32 %v1840, %v1841
        %v1843 = vshll.u32 920167782, %v1828
        %v1844 = vshrl.u32 1326507024, %v1829
        %v1845 = vor.u32 %v1843, %v1844
        %vm1846 = vcmp.lt.s32.totalorder %v1827, 1
        %vm1847 = vcmp.lt.s32.totalorder %v1827, 2
        %vm1848 = vcmp.lt.s32.totalorder %v1827, 3
        %vm1849 = vcmp.lt.s32.totalorder %v1827, 4
        %v1850 = vsel %vm1846, %v1830, %v1833
        %v1851 = vsel %vm1849, %v1839, 2102212464
        %v1852 = vsel %vm1848, %v1836, %v1851
        %v1853 = vsel %vm1847, %v1850, %v1852
        %v1854 = vsel %vm1846, %v1833, %v1836
        %v1855 = vsel %vm1849, %v1842, 920167782
        %v1856 = vsel %vm1848, %v1839, %v1855
        %v1857 = vsel %vm1847, %v1854, %v1856
        %v1858 = vsel %vm1846, %v1836, %v1839
        %v1859 = vsel %vm1849, %v1845, 1326507024
        %v1860 = vsel %vm1848, %v1842, %v1859
        %v1861 = vsel %vm1847, %v1858, %v1860
        %v1862 = vshll.u32 %v1822, 8
        %v1863 = vmul.u32.u64.compose %v1862, %v1861
        %v1864 = vextract.low.u32 %v1863
        %v1865 = vextract.high.u32 %v1863
        %v1866 = vmul.u32.u64.compose %v1862, %v1857
        %v1867 = vextract.low.u32 %v1866
        %v1868 = vextract.high.u32 %v1866
        %v1869 = vmul.u32 %v1862, %v1853
        %v1870 = vadd.s32 %v1865, %v1867
        %vm1871 = vc.u32 %v1865, %v1867
        %v1872 = vadd.s32 %v1868, 1
        %v1873 = vsel %vm1871, %v1872, %v1868
        %v1874 = vadd.s32 %v1869, %v1873
        %v1875 = vadd.s32 %v1874, 536870912
        %v1876 = vshrl.u32 %v1875, 30
        %v1877 = vshll.u32 %v1876, 30
        %v1878 = vsub.s32 %v1874, %v1877
        %vm1879 = vcmp.lt.s32.totalorder %v1878, 0
        %v1880 = vsub.s32 0, %v1878
        %v1881 = vsel %vm1879, %v1880, %v1878
        %v1882 = vclz %v1881
        %v1883 = vsub.s32 %v1882, 2
        %vm1884 = vcmp.gt.s32.totalorder 0, %v1883
        %v1885 = vsel %vm1884, 0, %v1883
        %v1886 = vsub.s32 32, %v1885
        %v1887 = vshll.u32 %v1878, %v1885
        %v1888 = vshrl.u32 %v1870, %v1886
        %v1889 = vor.u32 %v1887, %v1888
        %v1890 = vsub.s32 4294967266, %v1885
        %v1891 = vadd.s32 %v1890, 127
        %v1892 = vshll.u32 %v1891, 23
        %v1893 = vor.u32 4788187, %v1892
        %v1894 = vand.u32 2147483647, %v1893
        %v1896 = vcvt.s32.f32 %v1889
        %v1897 = vmul.f32 %v1896, %v1894
        %v1898 = vxor.u32 %v1897, 2147483648
        %v1899 = vsel %vm1816, %v1898, %v1897
        %v1900 = vsub.s32 4, %v1876
        %v1901 = vsel %vm1816, %v1900, %v1876
        %v1902 = vsel %vm1815, %v1092, %v1899
        %v1903 = vsel %vm1815, 0, %v1901
        %v1904 = vcosq.f32.pop %v1902
        %v1905 = vsinq.f32.pop %v1902
        %vm1906 = vweird.f32 %v1092
        %v1907 = vand.u32 %v1903, 3
        %vm1908 = vcmp.lt.s32.totalorder %v1907, 2
        %vm1909 = vcmp.eq.s32.totalorder %v1907, 0
        %v1910 = vxor.u32 %v1905, 2147483648
        %v1911 = vsel %vm1909, %v1904, %v1910
        %vm1912 = vcmp.eq.s32.totalorder %v1907, 2
        %v1913 = vxor.u32 %v1904, 2147483648
        %v1914 = vsel %vm1912, %v1913, %v1905
        %v1915 = vsel %vm1908, %v1911, %v1914
        %v1916 = vsel %vm1906, nan, %v1915
        %v1917 = vmul.f32 %v1077, %v1195
        %v1918 = vmul.f32 %v1078, %v1298
        %v1919 = vmul.f32 %v1079, %v1401
        %v1920 = vmul.f32 %v1080, %v1504
        %v1921 = vmul.f32 %v1081, %v1607
        %v1922 = vmul.f32 %v1082, %v1710
        %v1923 = vmul.f32 %v1083, %v1813
        %v1924 = vmul.f32 %v1084, %v1916
        %v1925 = vmul.f32 %v221, %v229
        %v1926 = vmul.f32 %v222, %v230
        %v1927 = vmul.f32 %v223, %v231
        %v1928 = vmul.f32 %v224, %v232
        %v1929 = vmul.f32 %v225, %v233
        %v1930 = vmul.f32 %v226, %v234
        %v1931 = vmul.f32 %v227, %v235
        %v1932 = vmul.f32 %v228, %v236
        %v1933 = vsub.f32 0.0, %v1925
        %v1934 = vsub.f32 0.0, %v1926
        %v1935 = vsub.f32 0.0, %v1927
        %v1936 = vsub.f32 0.0, %v1928
        %v1937 = vsub.f32 0.0, %v1929
        %v1938 = vsub.f32 0.0, %v1930
        %v1939 = vsub.f32 0.0, %v1931
        %v1940 = vsub.f32 0.0, %v1932
        %v1941 = vmul.f32 %v1933, 1.442695
        %v1942 = vpow.pop %v1941
        %v1943 = vmul.f32 %v1934, 1.442695
        %v1944 = vpow.pop %v1943
        %v1945 = vmul.f32 %v1935, 1.442695
        %v1946 = vpow.pop %v1945
        %v1947 = vmul.f32 %v1936, 1.442695
        %v1948 = vpow.pop %v1947
        %v1949 = vmul.f32 %v1937, 1.442695
        %v1950 = vpow.pop %v1949
        %v1951 = vmul.f32 %v1938, 1.442695
        %v1952 = vpow.pop %v1951
        %v1953 = vmul.f32 %v1939, 1.442695
        %v1954 = vpow.pop %v1953
        %v1955 = vmul.f32 %v1940, 1.442695
        %v1956 = vpow.pop %v1955
        %v1957 = vmul.f32 %v1917, %v1942
        %v1958 = vmul.f32 %v1918, %v1944
        %v1959 = vmul.f32 %v1919, %v1946
        %v1960 = vmul.f32 %v1920, %v1948
        %v1961 = vmul.f32 %v1921, %v1950
        %v1962 = vmul.f32 %v1922, %v1952
        %v1963 = vmul.f32 %v1923, %v1954
        %v1964 = vmul.f32 %v1924, %v1956
        %v1965 = vmul.f32 %v237, %v237
        %v1966 = vmul.f32 %v238, %v238
        %v1967 = vmul.f32 %v239, %v239
        %v1968 = vmul.f32 %v240, %v240
        %v1969 = vmul.f32 %v241, %v241
        %v1970 = vmul.f32 %v242, %v242
        %v1971 = vmul.f32 %v243, %v243
        %v1972 = vmul.f32 %v244, %v244
        %v1973 = vsub.f32 0.0, %v1965
        %v1974 = vsub.f32 0.0, %v1966
        %v1975 = vsub.f32 0.0, %v1967
        %v1976 = vsub.f32 0.0, %v1968
        %v1977 = vsub.f32 0.0, %v1969
        %v1978 = vsub.f32 0.0, %v1970
        %v1979 = vsub.f32 0.0, %v1971
        %v1980 = vsub.f32 0.0, %v1972
        %v1981 = vmul.f32 %v1973, 1.442695
        %v1982 = vpow.pop %v1981
        %v1983 = vmul.f32 %v1974, 1.442695
        %v1984 = vpow.pop %v1983
        %v1985 = vmul.f32 %v1975, 1.442695
        %v1986 = vpow.pop %v1985
        %v1987 = vmul.f32 %v1976, 1.442695
        %v1988 = vpow.pop %v1987
        %v1989 = vmul.f32 %v1977, 1.442695
        %v1990 = vpow.pop %v1989
        %v1991 = vmul.f32 %v1978, 1.442695
        %v1992 = vpow.pop %v1991
        %v1993 = vmul.f32 %v1979, 1.442695
        %v1994 = vpow.pop %v1993
        %v1995 = vmul.f32 %v1980, 1.442695
        %v1996 = vpow.pop %v1995
        %v1997 = vsub.f32 %v1957, %v1982
        %v1998 = vsub.f32 %v1958, %v1984
        %v1999 = vsub.f32 %v1959, %v1986
        %v2000 = vsub.f32 %v1960, %v1988
        %v2001 = vsub.f32 %v1961, %v1990
        %v2002 = vsub.f32 %v1962, %v1992
        %v2003 = vsub.f32 %v1963, %v1994
        %v2004 = vsub.f32 %v1964, %v1996
        %2005 = vst [vmem:[%s201] sm:$0xff] %v1997
        %2006 = vst [vmem:[%s201 + $0x8] sm:$0xff] %v1998
        %2007 = vst [vmem:[%s201 + $0x10] sm:$0xff] %v1999
        %2008 = vst [vmem:[%s201 + $0x18] sm:$0xff] %v2000
        %2009 = vst [vmem:[%s201 + $0x20] sm:$0xff] %v2001
        %2010 = vst [vmem:[%s201 + $0x28] sm:$0xff] %v2002
        %2011 = vst [vmem:[%s201 + $0x30] sm:$0xff] %v2003
        %2012 = vst [vmem:[%s201 + $0x38] sm:$0xff] %v2004
        %s2013 = sand.u32 %s82, 1
        %s2014 = scalar_lea.sflag [#allocation4], %s2013
        %s2015 = sand.u32 %s82, 1
        %s2016 = smul.addr %s2015, 64
        %s2017 = scalar_lea.vmem [#allocation7], %s2016
        // Predicated region
        $region37: #{tpu_custom_call.1} parent=27 // pred_check
          %p2018 = pneg %p92
        $region38: #{tpu_custom_call.1} parent=27 // pred_check_branch
          %2020 = sbr.rel (%p2018) target = $region40
        $region39: #{tpu_custom_call.1} parent=27 // pred_region
          %s2021 = smul.u32 8, %s22
          %s2023 = ssub.s32 1024, 1024
          %2024 = vsyncadd %s2014, %s2023
          %s2025 = smul.addr %s2021, 128
          %s2026 = scalar_lea.hbm %s2, %s2025
          %s2027 = sshll.u32 %s2017, 4
          %s2028 = int_to_ptr.vmem [resolvable:$true] %s2027
          %2033 = dma.vmem_to_hbm [thread:$0]  %s2028, 1024, %s2026, %s2014, 128, 128, 8
        $region40: #{tpu_custom_call.1} parent=27 // pred_fallthru
          _
      $region28: #{tpu_custom_call.1} parent=5 // pred_fallthru
        _
      %p2034 = scmp.le.s32.totalorder 2, %s17
      // Predicated region
      $region41: #{tpu_custom_call.1} parent=5 // pred_check
        %p2035 = pneg %p2034
      $region42: #{tpu_custom_call.1} parent=5 // pred_check_branch
        %2037 = sbr.rel (%p2035) target = $region44
      $region43: #{tpu_custom_call.1} parent=5 // pred_region
        %s2038 = ssub.s32 %s17, 2
        // Predicated region
        $region45: #{tpu_custom_call.1} parent=43 // pred_check
          %p2039 = pneg %p98
        $region46: #{tpu_custom_call.1} parent=43 // pred_check_branch
          %2041 = sbr.rel (%p2039) target = $region48
        $region47: #{tpu_custom_call.1} parent=43 // pred_region
          %s2042 = sand.u32 %s83, 1
          %s2043 = scalar_lea.sflag [#allocation4], %s2042
          %s2044 = sand.u32 %s83, 1
          %s2045 = smul.addr %s2044, 64
          %s2046 = scalar_lea.vmem [#allocation7], %s2045
          %2047 = dma.done %s2043, 1024
        $region48: #{tpu_custom_call.1} parent=43 // pred_fallthru
          _
      $region44: #{tpu_custom_call.1} parent=5 // pred_fallthru
        _
    $region6: #{tpu_custom_call.1} parent=1 // loop_footer
      %s21 = sadd.s32 1, %s17
    $region7: #{tpu_custom_call.1} parent=1 // loop_footer_branch
      %16 = sbr.rel target = $region3
    $region8: #{tpu_custom_call.1} parent=1 // loop_exit
      _
    %2048 = vsyncpa [#allocation3], 1
    %s2049 = scalar_lea.sflag [#allocation3], 1
    %2050 = vsyncpa %s2049, 1
    %2051 = vsyncpa [#allocation6], 1
    %s2052 = scalar_lea.sflag [#allocation6], 1
    %2053 = vsyncpa %s2052, 1
    %2054 = vsyncpa [#allocation4], 1
    %s2055 = scalar_lea.sflag [#allocation4], 1
    %2056 = vsyncpa %s2055, 1

</llo_original>
